<compile_context>
chip_gen: v5e
topology: v5e:2x2
jax: 0.10.0
libtpu: 0.0.40
codegen_flags: <defaults>
</compile_context>

<pallas_src>
import jax
import jax.numpy as jnp
import numpy as np
from jax.experimental import pallas as pl
from jax.experimental.pallas import tpu as pltpu


def sl_cnn_kernel(x_ref, cw_ref, cb_ref, lw_ref, lb_ref, out_ref):
    # x_ref : (C, H, Bt, W)    VMEM  f32  (batch tile; channel/height are leading "free" dims)
    # cw_ref: (C*9,)           SMEM  f32  (conv weight, flattened c*9 + di*3 + dj, OIHW order)
    # cb_ref: (1,)             SMEM  f32  (conv bias)
    # lw_ref: (Hc, Wc, Kp)     VMEM  f32  (linear weight, transposed + reshaped + K-padded)
    # lb_ref: (1, Kp)          VMEM  f32  (linear bias, K-padded)
    # out_ref: (Bt, Kp)        VMEM  f32
    C, H, Bt, W = x_ref.shape
    Hc, Wc = H - 2, W - 2

    x = x_ref[...]  # already f32

    # Hoist the lane-axis (dj) shifts out of the conv loop: 3 shifted views instead of 36.
    xs = [x[:, :, :, dj:dj + Wc] for dj in range(3)]  # each (C, H, Bt, Wc)

    # Conv2d(C -> 1, kernel=3, stride=1, padding=0) + bias, unrolled over (c, di, dj).
    # c / di slices are major-axis views (cheap); only the 3 hoisted dj slices touch lanes.
    acc = jnp.full((Hc, Bt, Wc), cb_ref[0], dtype=jnp.float32)
    for c in range(C):
        for di in range(3):
            for dj in range(3):
                w = cw_ref[c * 9 + di * 3 + dj]
                acc = acc + xs[dj][c, di:di + Hc, :, :] * w

    relu = jnp.maximum(acc, 0.0)  # (Hc, Bt, Wc) ; relu[i, b, j] == conv_out[b, i, j]

    # Flatten(start_dim=1) + Linear as ONE batched contraction (batch dim = conv row i):
    #   out[b, k] = sum_i sum_j relu[i, b, j] * lw[i, j, k] + lb[k]
    tmp = jax.lax.dot_general(
        relu, lw_ref[...],
        dimension_numbers=(((2,), (1,)), ((0,), (0,))),   # contract Wc, batch over Hc
        preferred_element_type=jnp.float32)                # (Hc, Bt, Kp)
    out_ref[...] = lb_ref[...] + jnp.sum(tmp, axis=0)


def sl_cnn_forward(x, conv_w, conv_b, lin_w, lin_b, *, batch_tile=None):
    """x: (B, C, H, W) f32; conv_w: (1, C, 3, 3); conv_b: (1,);
       lin_w: (class_num, (H-2)*(W-2)); lin_b: (class_num,)."""
    B, C, H, W = x.shape
    Hc, Wc = H - 2, W - 2
    F = Hc * Wc
    K = lin_w.shape[0]
    Kp = max(128, ((K + 127) // 128) * 128)  # lane-dense padded class dim

    # Batch tile: full batch if small (then block dim == array dim), else 128 (multiple of 8).
    if batch_tile is None:
        batch_tile = B if B <= 128 else 128
    grid = (pl.cdiv(B, batch_tile),)

    # Parameter / input reshapes are plain-JAX glue (outside the kernel).
    x_t = jnp.transpose(x.astype(jnp.float32), (1, 2, 0, 3))      # (C, H, B, W)
    cw_flat = conv_w.reshape(-1).astype(jnp.float32)              # (C*9,)
    cb = conv_b.reshape(1).astype(jnp.float32)                    # (1,)
    # Row-major flatten order i*Wc + j matches PyTorch nn.Flatten.
    lw3 = lin_w.T.reshape(Hc, Wc, K).astype(jnp.float32)          # (Hc, Wc, K)
    lw3 = jnp.pad(lw3, ((0, 0), (0, 0), (0, Kp - K)))             # (Hc, Wc, Kp)
    lb = jnp.pad(lin_b.reshape(1, K).astype(jnp.float32),
                 ((0, 0), (0, Kp - K)))                           # (1, Kp)

    cost = pl.CostEstimate(
        flops=2 * B * Hc * Wc * C * 9 + 2 * B * F * Kp,
        transcendentals=0,
        bytes_accessed=(B * C * H * W + F * Kp + B * Kp + C * 9 + 1 + Kp) * 4,
    )

    out_p = pl.pallas_call(
        sl_cnn_kernel,
        out_shape=jax.ShapeDtypeStruct((B, Kp), jnp.float32),
        grid_spec=pltpu.PrefetchScalarGridSpec(
            num_scalar_prefetch=0,
            grid=grid,
            in_specs=[
                # x: batch-tiled block (channel/height/W full).
                pl.BlockSpec((C, H, batch_tile, W), lambda b: (0, 0, b, 0)),
                # conv params: scalars in SMEM, untiled.
                pl.BlockSpec(memory_space=pltpu.MemorySpace.SMEM),
                pl.BlockSpec(memory_space=pltpu.MemorySpace.SMEM),
                # linear weight / bias: same full block every grid step (resident in VMEM).
                pl.BlockSpec((Hc, Wc, Kp), lambda b: (0, 0, 0)),
                pl.BlockSpec((1, Kp), lambda b: (0, 0)),
            ],
            out_specs=pl.BlockSpec((batch_tile, Kp), lambda b: (b, 0)),
        ),
        compiler_params=pltpu.CompilerParams(
            dimension_semantics=("parallel",),
        ),
        cost_estimate=cost,
    )(x_t, cw_flat, cb, lw3, lb)

    # Drop the lane padding on the class dimension.
    return out_p[:, :K]


def reference_forward(x, conv_w, conv_b, lin_w, lin_b):
    """Pure-JAX reference matching the PyTorch forward."""
    y = jax.lax.conv_general_dilated(
        x, conv_w, window_strides=(1, 1), padding="VALID",
        dimension_numbers=("NCHW", "OIHW", "NCHW"))
    y = y + conv_b.reshape(1, 1, 1, 1)
    y = jnp.maximum(y, 0.0)
    y = y.reshape(x.shape[0], -1)
    return y @ lin_w.T + lin_b


if __name__ == "__main__":
    # Small shapes consistent with the module: (batch, in_channel, height, width)
    B, C, H, W = 2, 4, 16, 16
    class_num = 10
    F = (H - 2) * (W - 2)

    key = jax.random.PRNGKey(0)
    kx, kcw, kcb, klw, klb = jax.random.split(key, 5)

    x = jax.random.normal(kx, (B, C, H, W), dtype=jnp.float32)

    # Deterministic parameter init mimicking PyTorch's default uniform(-1/sqrt(fan_in), 1/sqrt(fan_in)).
    conv_fan_in = C * 3 * 3
    conv_bound = 1.0 / np.sqrt(conv_fan_in)
    conv_w = jax.random.uniform(kcw, (1, C, 3, 3), jnp.float32, -conv_bound, conv_bound)
    conv_b = jax.random.uniform(kcb, (1,), jnp.float32, -conv_bound, conv_bound)

    lin_bound = 1.0 / np.sqrt(F)
    lin_w = jax.random.uniform(klw, (class_num, F), jnp.float32, -lin_bound, lin_bound)
    lin_b = jax.random.uniform(klb, (class_num,), jnp.float32, -lin_bound, lin_bound)

    out = sl_cnn_forward(x, conv_w, conv_b, lin_w, lin_b)
    out = jax.block_until_ready(out)

    ref = reference_forward(x, conv_w, conv_b, lin_w, lin_b)
    np.testing.assert_allclose(np.asarray(out), np.asarray(ref), rtol=1e-4, atol=1e-5)

    print("KERNEL_OK")
</pallas_src>

<mosaic_0001>
module attributes {stable_mosaic.version = 11 : i64} {
  func.func @sl_cnn_kernel(%arg0: i32, %arg1: memref<4x16x2x16xf32, #tpu.memory_space<vmem>>, %arg2: memref<36xf32, #tpu.memory_space<smem>>, %arg3: memref<1xf32, #tpu.memory_space<smem>>, %arg4: memref<14x14x128xf32, #tpu.memory_space<vmem>>, %arg5: memref<1x128xf32, #tpu.memory_space<vmem>>, %arg6: memref<2x128xf32, #tpu.memory_space<vmem>>) attributes {dimension_semantics = [#tpu.dimension_semantics<parallel>], iteration_bounds = array<i64: 1>, scalar_prefetch = 0 : i64, scratch_operands = 0 : i64, tpu.core_type = #tpu.core_type<tc>, window_params = [{transform_indices = @transform_0, window_bounds = array<i64: 4, 16, 2, 16>}, {transform_indices = @transform_1, window_bounds = array<i64: 36>}, {transform_indices = @transform_2, window_bounds = array<i64: 1>}, {pipeline_mode = #tpu.pipeline_mode<synchronous>, transform_indices = @transform_3, window_bounds = array<i64: 14, 14, 128>}, {pipeline_mode = #tpu.pipeline_mode<synchronous>, transform_indices = @transform_4, window_bounds = array<i64: 1, 128>}, {transform_indices = @transform_5, window_bounds = array<i64: 2, 128>}]} {
    %c0 = arith.constant 0 : index
    %c0_0 = arith.constant 0 : index
    %c0_1 = arith.constant 0 : index
    %c0_2 = arith.constant 0 : index
    %0 = vector.load %arg1[%c0, %c0_0, %c0_1, %c0_2] : memref<4x16x2x16xf32, #tpu.memory_space<vmem>>, vector<4x16x2x16xf32>
    %1 = vector.extract_strided_slice %0 {offsets = [0, 0, 0, 0], sizes = [4, 16, 2, 14], strides = [1, 1, 1, 1]} : vector<4x16x2x16xf32> to vector<4x16x2x14xf32>
    %2 = vector.extract_strided_slice %0 {offsets = [0, 0, 0, 1], sizes = [4, 16, 2, 14], strides = [1, 1, 1, 1]} : vector<4x16x2x16xf32> to vector<4x16x2x14xf32>
    %3 = vector.extract_strided_slice %0 {offsets = [0, 0, 0, 2], sizes = [4, 16, 2, 14], strides = [1, 1, 1, 1]} : vector<4x16x2x16xf32> to vector<4x16x2x14xf32>
    %c0_3 = arith.constant 0 : index
    %4 = memref.load %arg3[%c0_3] : memref<1xf32, #tpu.memory_space<smem>>
    %5 = vector.broadcast %4 : f32 to vector<14x2x14xf32>
    %c0_4 = arith.constant 0 : index
    %6 = memref.load %arg2[%c0_4] : memref<36xf32, #tpu.memory_space<smem>>
    %7 = vector.extract_strided_slice %1 {offsets = [0, 0, 0, 0], sizes = [1, 14, 2, 14], strides = [1, 1, 1, 1]} : vector<4x16x2x14xf32> to vector<1x14x2x14xf32>
    %8 = vector.shape_cast %7 : vector<1x14x2x14xf32> to vector<14x2x14xf32>
    %9 = vector.broadcast %6 : f32 to vector<14x2x14xf32>
    %10 = arith.mulf %8, %9 : vector<14x2x14xf32>
    %11 = arith.addf %5, %10 : vector<14x2x14xf32>
    %c1 = arith.constant 1 : index
    %12 = memref.load %arg2[%c1] : memref<36xf32, #tpu.memory_space<smem>>
    %13 = vector.extract_strided_slice %2 {offsets = [0, 0, 0, 0], sizes = [1, 14, 2, 14], strides = [1, 1, 1, 1]} : vector<4x16x2x14xf32> to vector<1x14x2x14xf32>
    %14 = vector.shape_cast %13 : vector<1x14x2x14xf32> to vector<14x2x14xf32>
    %15 = vector.broadcast %12 : f32 to vector<14x2x14xf32>
    %16 = arith.mulf %14, %15 : vector<14x2x14xf32>
    %17 = arith.addf %11, %16 : vector<14x2x14xf32>
    %c2 = arith.constant 2 : index
    %18 = memref.load %arg2[%c2] : memref<36xf32, #tpu.memory_space<smem>>
    %19 = vector.extract_strided_slice %3 {offsets = [0, 0, 0, 0], sizes = [1, 14, 2, 14], strides = [1, 1, 1, 1]} : vector<4x16x2x14xf32> to vector<1x14x2x14xf32>
    %20 = vector.shape_cast %19 : vector<1x14x2x14xf32> to vector<14x2x14xf32>
    %21 = vector.broadcast %18 : f32 to vector<14x2x14xf32>
    %22 = arith.mulf %20, %21 : vector<14x2x14xf32>
    %23 = arith.addf %17, %22 : vector<14x2x14xf32>
    %c3 = arith.constant 3 : index
    %24 = memref.load %arg2[%c3] : memref<36xf32, #tpu.memory_space<smem>>
    %25 = vector.extract_strided_slice %1 {offsets = [0, 1, 0, 0], sizes = [1, 14, 2, 14], strides = [1, 1, 1, 1]} : vector<4x16x2x14xf32> to vector<1x14x2x14xf32>
    %26 = vector.shape_cast %25 : vector<1x14x2x14xf32> to vector<14x2x14xf32>
    %27 = vector.broadcast %24 : f32 to vector<14x2x14xf32>
    %28 = arith.mulf %26, %27 : vector<14x2x14xf32>
    %29 = arith.addf %23, %28 : vector<14x2x14xf32>
    %c4 = arith.constant 4 : index
    %30 = memref.load %arg2[%c4] : memref<36xf32, #tpu.memory_space<smem>>
    %31 = vector.extract_strided_slice %2 {offsets = [0, 1, 0, 0], sizes = [1, 14, 2, 14], strides = [1, 1, 1, 1]} : vector<4x16x2x14xf32> to vector<1x14x2x14xf32>
    %32 = vector.shape_cast %31 : vector<1x14x2x14xf32> to vector<14x2x14xf32>
    %33 = vector.broadcast %30 : f32 to vector<14x2x14xf32>
    %34 = arith.mulf %32, %33 : vector<14x2x14xf32>
    %35 = arith.addf %29, %34 : vector<14x2x14xf32>
    %c5 = arith.constant 5 : index
    %36 = memref.load %arg2[%c5] : memref<36xf32, #tpu.memory_space<smem>>
    %37 = vector.extract_strided_slice %3 {offsets = [0, 1, 0, 0], sizes = [1, 14, 2, 14], strides = [1, 1, 1, 1]} : vector<4x16x2x14xf32> to vector<1x14x2x14xf32>
    %38 = vector.shape_cast %37 : vector<1x14x2x14xf32> to vector<14x2x14xf32>
    %39 = vector.broadcast %36 : f32 to vector<14x2x14xf32>
    %40 = arith.mulf %38, %39 : vector<14x2x14xf32>
    %41 = arith.addf %35, %40 : vector<14x2x14xf32>
    %c6 = arith.constant 6 : index
    %42 = memref.load %arg2[%c6] : memref<36xf32, #tpu.memory_space<smem>>
    %43 = vector.extract_strided_slice %1 {offsets = [0, 2, 0, 0], sizes = [1, 14, 2, 14], strides = [1, 1, 1, 1]} : vector<4x16x2x14xf32> to vector<1x14x2x14xf32>
    %44 = vector.shape_cast %43 : vector<1x14x2x14xf32> to vector<14x2x14xf32>
    %45 = vector.broadcast %42 : f32 to vector<14x2x14xf32>
    %46 = arith.mulf %44, %45 : vector<14x2x14xf32>
    %47 = arith.addf %41, %46 : vector<14x2x14xf32>
    %c7 = arith.constant 7 : index
    %48 = memref.load %arg2[%c7] : memref<36xf32, #tpu.memory_space<smem>>
    %49 = vector.extract_strided_slice %2 {offsets = [0, 2, 0, 0], sizes = [1, 14, 2, 14], strides = [1, 1, 1, 1]} : vector<4x16x2x14xf32> to vector<1x14x2x14xf32>
    %50 = vector.shape_cast %49 : vector<1x14x2x14xf32> to vector<14x2x14xf32>
    %51 = vector.broadcast %48 : f32 to vector<14x2x14xf32>
    %52 = arith.mulf %50, %51 : vector<14x2x14xf32>
    %53 = arith.addf %47, %52 : vector<14x2x14xf32>
    %c8 = arith.constant 8 : index
    %54 = memref.load %arg2[%c8] : memref<36xf32, #tpu.memory_space<smem>>
    %55 = vector.extract_strided_slice %3 {offsets = [0, 2, 0, 0], sizes = [1, 14, 2, 14], strides = [1, 1, 1, 1]} : vector<4x16x2x14xf32> to vector<1x14x2x14xf32>
    %56 = vector.shape_cast %55 : vector<1x14x2x14xf32> to vector<14x2x14xf32>
    %57 = vector.broadcast %54 : f32 to vector<14x2x14xf32>
    %58 = arith.mulf %56, %57 : vector<14x2x14xf32>
    %59 = arith.addf %53, %58 : vector<14x2x14xf32>
    %c9 = arith.constant 9 : index
    %60 = memref.load %arg2[%c9] : memref<36xf32, #tpu.memory_space<smem>>
    %61 = vector.extract_strided_slice %1 {offsets = [1, 0, 0, 0], sizes = [1, 14, 2, 14], strides = [1, 1, 1, 1]} : vector<4x16x2x14xf32> to vector<1x14x2x14xf32>
    %62 = vector.shape_cast %61 : vector<1x14x2x14xf32> to vector<14x2x14xf32>
    %63 = vector.broadcast %60 : f32 to vector<14x2x14xf32>
    %64 = arith.mulf %62, %63 : vector<14x2x14xf32>
    %65 = arith.addf %59, %64 : vector<14x2x14xf32>
    %c10 = arith.constant 10 : index
    %66 = memref.load %arg2[%c10] : memref<36xf32, #tpu.memory_space<smem>>
    %67 = vector.extract_strided_slice %2 {offsets = [1, 0, 0, 0], sizes = [1, 14, 2, 14], strides = [1, 1, 1, 1]} : vector<4x16x2x14xf32> to vector<1x14x2x14xf32>
    %68 = vector.shape_cast %67 : vector<1x14x2x14xf32> to vector<14x2x14xf32>
    %69 = vector.broadcast %66 : f32 to vector<14x2x14xf32>
    %70 = arith.mulf %68, %69 : vector<14x2x14xf32>
    %71 = arith.addf %65, %70 : vector<14x2x14xf32>
    %c11 = arith.constant 11 : index
    %72 = memref.load %arg2[%c11] : memref<36xf32, #tpu.memory_space<smem>>
    %73 = vector.extract_strided_slice %3 {offsets = [1, 0, 0, 0], sizes = [1, 14, 2, 14], strides = [1, 1, 1, 1]} : vector<4x16x2x14xf32> to vector<1x14x2x14xf32>
    %74 = vector.shape_cast %73 : vector<1x14x2x14xf32> to vector<14x2x14xf32>
    %75 = vector.broadcast %72 : f32 to vector<14x2x14xf32>
    %76 = arith.mulf %74, %75 : vector<14x2x14xf32>
    %77 = arith.addf %71, %76 : vector<14x2x14xf32>
    %c12 = arith.constant 12 : index
    %78 = memref.load %arg2[%c12] : memref<36xf32, #tpu.memory_space<smem>>
    %79 = vector.extract_strided_slice %1 {offsets = [1, 1, 0, 0], sizes = [1, 14, 2, 14], strides = [1, 1, 1, 1]} : vector<4x16x2x14xf32> to vector<1x14x2x14xf32>
    %80 = vector.shape_cast %79 : vector<1x14x2x14xf32> to vector<14x2x14xf32>
    %81 = vector.broadcast %78 : f32 to vector<14x2x14xf32>
    %82 = arith.mulf %80, %81 : vector<14x2x14xf32>
    %83 = arith.addf %77, %82 : vector<14x2x14xf32>
    %c13 = arith.constant 13 : index
    %84 = memref.load %arg2[%c13] : memref<36xf32, #tpu.memory_space<smem>>
    %85 = vector.extract_strided_slice %2 {offsets = [1, 1, 0, 0], sizes = [1, 14, 2, 14], strides = [1, 1, 1, 1]} : vector<4x16x2x14xf32> to vector<1x14x2x14xf32>
    %86 = vector.shape_cast %85 : vector<1x14x2x14xf32> to vector<14x2x14xf32>
    %87 = vector.broadcast %84 : f32 to vector<14x2x14xf32>
    %88 = arith.mulf %86, %87 : vector<14x2x14xf32>
    %89 = arith.addf %83, %88 : vector<14x2x14xf32>
    %c14 = arith.constant 14 : index
    %90 = memref.load %arg2[%c14] : memref<36xf32, #tpu.memory_space<smem>>
    %91 = vector.extract_strided_slice %3 {offsets = [1, 1, 0, 0], sizes = [1, 14, 2, 14], strides = [1, 1, 1, 1]} : vector<4x16x2x14xf32> to vector<1x14x2x14xf32>
    %92 = vector.shape_cast %91 : vector<1x14x2x14xf32> to vector<14x2x14xf32>
    %93 = vector.broadcast %90 : f32 to vector<14x2x14xf32>
    %94 = arith.mulf %92, %93 : vector<14x2x14xf32>
    %95 = arith.addf %89, %94 : vector<14x2x14xf32>
    %c15 = arith.constant 15 : index
    %96 = memref.load %arg2[%c15] : memref<36xf32, #tpu.memory_space<smem>>
    %97 = vector.extract_strided_slice %1 {offsets = [1, 2, 0, 0], sizes = [1, 14, 2, 14], strides = [1, 1, 1, 1]} : vector<4x16x2x14xf32> to vector<1x14x2x14xf32>
    %98 = vector.shape_cast %97 : vector<1x14x2x14xf32> to vector<14x2x14xf32>
    %99 = vector.broadcast %96 : f32 to vector<14x2x14xf32>
    %100 = arith.mulf %98, %99 : vector<14x2x14xf32>
    %101 = arith.addf %95, %100 : vector<14x2x14xf32>
    %c16 = arith.constant 16 : index
    %102 = memref.load %arg2[%c16] : memref<36xf32, #tpu.memory_space<smem>>
    %103 = vector.extract_strided_slice %2 {offsets = [1, 2, 0, 0], sizes = [1, 14, 2, 14], strides = [1, 1, 1, 1]} : vector<4x16x2x14xf32> to vector<1x14x2x14xf32>
    %104 = vector.shape_cast %103 : vector<1x14x2x14xf32> to vector<14x2x14xf32>
    %105 = vector.broadcast %102 : f32 to vector<14x2x14xf32>
    %106 = arith.mulf %104, %105 : vector<14x2x14xf32>
    %107 = arith.addf %101, %106 : vector<14x2x14xf32>
    %c17 = arith.constant 17 : index
    %108 = memref.load %arg2[%c17] : memref<36xf32, #tpu.memory_space<smem>>
    %109 = vector.extract_strided_slice %3 {offsets = [1, 2, 0, 0], sizes = [1, 14, 2, 14], strides = [1, 1, 1, 1]} : vector<4x16x2x14xf32> to vector<1x14x2x14xf32>
    %110 = vector.shape_cast %109 : vector<1x14x2x14xf32> to vector<14x2x14xf32>
    %111 = vector.broadcast %108 : f32 to vector<14x2x14xf32>
    %112 = arith.mulf %110, %111 : vector<14x2x14xf32>
    %113 = arith.addf %107, %112 : vector<14x2x14xf32>
    %c18 = arith.constant 18 : index
    %114 = memref.load %arg2[%c18] : memref<36xf32, #tpu.memory_space<smem>>
    %115 = vector.extract_strided_slice %1 {offsets = [2, 0, 0, 0], sizes = [1, 14, 2, 14], strides = [1, 1, 1, 1]} : vector<4x16x2x14xf32> to vector<1x14x2x14xf32>
    %116 = vector.shape_cast %115 : vector<1x14x2x14xf32> to vector<14x2x14xf32>
    %117 = vector.broadcast %114 : f32 to vector<14x2x14xf32>
    %118 = arith.mulf %116, %117 : vector<14x2x14xf32>
    %119 = arith.addf %113, %118 : vector<14x2x14xf32>
    %c19 = arith.constant 19 : index
    %120 = memref.load %arg2[%c19] : memref<36xf32, #tpu.memory_space<smem>>
    %121 = vector.extract_strided_slice %2 {offsets = [2, 0, 0, 0], sizes = [1, 14, 2, 14], strides = [1, 1, 1, 1]} : vector<4x16x2x14xf32> to vector<1x14x2x14xf32>
    %122 = vector.shape_cast %121 : vector<1x14x2x14xf32> to vector<14x2x14xf32>
    %123 = vector.broadcast %120 : f32 to vector<14x2x14xf32>
    %124 = arith.mulf %122, %123 : vector<14x2x14xf32>
    %125 = arith.addf %119, %124 : vector<14x2x14xf32>
    %c20 = arith.constant 20 : index
    %126 = memref.load %arg2[%c20] : memref<36xf32, #tpu.memory_space<smem>>
    %127 = vector.extract_strided_slice %3 {offsets = [2, 0, 0, 0], sizes = [1, 14, 2, 14], strides = [1, 1, 1, 1]} : vector<4x16x2x14xf32> to vector<1x14x2x14xf32>
    %128 = vector.shape_cast %127 : vector<1x14x2x14xf32> to vector<14x2x14xf32>
    %129 = vector.broadcast %126 : f32 to vector<14x2x14xf32>
    %130 = arith.mulf %128, %129 : vector<14x2x14xf32>
    %131 = arith.addf %125, %130 : vector<14x2x14xf32>
    %c21 = arith.constant 21 : index
    %132 = memref.load %arg2[%c21] : memref<36xf32, #tpu.memory_space<smem>>
    %133 = vector.extract_strided_slice %1 {offsets = [2, 1, 0, 0], sizes = [1, 14, 2, 14], strides = [1, 1, 1, 1]} : vector<4x16x2x14xf32> to vector<1x14x2x14xf32>
    %134 = vector.shape_cast %133 : vector<1x14x2x14xf32> to vector<14x2x14xf32>
    %135 = vector.broadcast %132 : f32 to vector<14x2x14xf32>
    %136 = arith.mulf %134, %135 : vector<14x2x14xf32>
    %137 = arith.addf %131, %136 : vector<14x2x14xf32>
    %c22 = arith.constant 22 : index
    %138 = memref.load %arg2[%c22] : memref<36xf32, #tpu.memory_space<smem>>
    %139 = vector.extract_strided_slice %2 {offsets = [2, 1, 0, 0], sizes = [1, 14, 2, 14], strides = [1, 1, 1, 1]} : vector<4x16x2x14xf32> to vector<1x14x2x14xf32>
    %140 = vector.shape_cast %139 : vector<1x14x2x14xf32> to vector<14x2x14xf32>
    %141 = vector.broadcast %138 : f32 to vector<14x2x14xf32>
    %142 = arith.mulf %140, %141 : vector<14x2x14xf32>
    %143 = arith.addf %137, %142 : vector<14x2x14xf32>
    %c23 = arith.constant 23 : index
    %144 = memref.load %arg2[%c23] : memref<36xf32, #tpu.memory_space<smem>>
    %145 = vector.extract_strided_slice %3 {offsets = [2, 1, 0, 0], sizes = [1, 14, 2, 14], strides = [1, 1, 1, 1]} : vector<4x16x2x14xf32> to vector<1x14x2x14xf32>
    %146 = vector.shape_cast %145 : vector<1x14x2x14xf32> to vector<14x2x14xf32>
    %147 = vector.broadcast %144 : f32 to vector<14x2x14xf32>
    %148 = arith.mulf %146, %147 : vector<14x2x14xf32>
    %149 = arith.addf %143, %148 : vector<14x2x14xf32>
    %c24 = arith.constant 24 : index
    %150 = memref.load %arg2[%c24] : memref<36xf32, #tpu.memory_space<smem>>
    %151 = vector.extract_strided_slice %1 {offsets = [2, 2, 0, 0], sizes = [1, 14, 2, 14], strides = [1, 1, 1, 1]} : vector<4x16x2x14xf32> to vector<1x14x2x14xf32>
    %152 = vector.shape_cast %151 : vector<1x14x2x14xf32> to vector<14x2x14xf32>
    %153 = vector.broadcast %150 : f32 to vector<14x2x14xf32>
    %154 = arith.mulf %152, %153 : vector<14x2x14xf32>
    %155 = arith.addf %149, %154 : vector<14x2x14xf32>
    %c25 = arith.constant 25 : index
    %156 = memref.load %arg2[%c25] : memref<36xf32, #tpu.memory_space<smem>>
    %157 = vector.extract_strided_slice %2 {offsets = [2, 2, 0, 0], sizes = [1, 14, 2, 14], strides = [1, 1, 1, 1]} : vector<4x16x2x14xf32> to vector<1x14x2x14xf32>
    %158 = vector.shape_cast %157 : vector<1x14x2x14xf32> to vector<14x2x14xf32>
    %159 = vector.broadcast %156 : f32 to vector<14x2x14xf32>
    %160 = arith.mulf %158, %159 : vector<14x2x14xf32>
    %161 = arith.addf %155, %160 : vector<14x2x14xf32>
    %c26 = arith.constant 26 : index
    %162 = memref.load %arg2[%c26] : memref<36xf32, #tpu.memory_space<smem>>
    %163 = vector.extract_strided_slice %3 {offsets = [2, 2, 0, 0], sizes = [1, 14, 2, 14], strides = [1, 1, 1, 1]} : vector<4x16x2x14xf32> to vector<1x14x2x14xf32>
    %164 = vector.shape_cast %163 : vector<1x14x2x14xf32> to vector<14x2x14xf32>
    %165 = vector.broadcast %162 : f32 to vector<14x2x14xf32>
    %166 = arith.mulf %164, %165 : vector<14x2x14xf32>
    %167 = arith.addf %161, %166 : vector<14x2x14xf32>
    %c27 = arith.constant 27 : index
    %168 = memref.load %arg2[%c27] : memref<36xf32, #tpu.memory_space<smem>>
    %169 = vector.extract_strided_slice %1 {offsets = [3, 0, 0, 0], sizes = [1, 14, 2, 14], strides = [1, 1, 1, 1]} : vector<4x16x2x14xf32> to vector<1x14x2x14xf32>
    %170 = vector.shape_cast %169 : vector<1x14x2x14xf32> to vector<14x2x14xf32>
    %171 = vector.broadcast %168 : f32 to vector<14x2x14xf32>
    %172 = arith.mulf %170, %171 : vector<14x2x14xf32>
    %173 = arith.addf %167, %172 : vector<14x2x14xf32>
    %c28 = arith.constant 28 : index
    %174 = memref.load %arg2[%c28] : memref<36xf32, #tpu.memory_space<smem>>
    %175 = vector.extract_strided_slice %2 {offsets = [3, 0, 0, 0], sizes = [1, 14, 2, 14], strides = [1, 1, 1, 1]} : vector<4x16x2x14xf32> to vector<1x14x2x14xf32>
    %176 = vector.shape_cast %175 : vector<1x14x2x14xf32> to vector<14x2x14xf32>
    %177 = vector.broadcast %174 : f32 to vector<14x2x14xf32>
    %178 = arith.mulf %176, %177 : vector<14x2x14xf32>
    %179 = arith.addf %173, %178 : vector<14x2x14xf32>
    %c29 = arith.constant 29 : index
    %180 = memref.load %arg2[%c29] : memref<36xf32, #tpu.memory_space<smem>>
    %181 = vector.extract_strided_slice %3 {offsets = [3, 0, 0, 0], sizes = [1, 14, 2, 14], strides = [1, 1, 1, 1]} : vector<4x16x2x14xf32> to vector<1x14x2x14xf32>
    %182 = vector.shape_cast %181 : vector<1x14x2x14xf32> to vector<14x2x14xf32>
    %183 = vector.broadcast %180 : f32 to vector<14x2x14xf32>
    %184 = arith.mulf %182, %183 : vector<14x2x14xf32>
    %185 = arith.addf %179, %184 : vector<14x2x14xf32>
    %c30 = arith.constant 30 : index
    %186 = memref.load %arg2[%c30] : memref<36xf32, #tpu.memory_space<smem>>
    %187 = vector.extract_strided_slice %1 {offsets = [3, 1, 0, 0], sizes = [1, 14, 2, 14], strides = [1, 1, 1, 1]} : vector<4x16x2x14xf32> to vector<1x14x2x14xf32>
    %188 = vector.shape_cast %187 : vector<1x14x2x14xf32> to vector<14x2x14xf32>
    %189 = vector.broadcast %186 : f32 to vector<14x2x14xf32>
    %190 = arith.mulf %188, %189 : vector<14x2x14xf32>
    %191 = arith.addf %185, %190 : vector<14x2x14xf32>
    %c31 = arith.constant 31 : index
    %192 = memref.load %arg2[%c31] : memref<36xf32, #tpu.memory_space<smem>>
    %193 = vector.extract_strided_slice %2 {offsets = [3, 1, 0, 0], sizes = [1, 14, 2, 14], strides = [1, 1, 1, 1]} : vector<4x16x2x14xf32> to vector<1x14x2x14xf32>
    %194 = vector.shape_cast %193 : vector<1x14x2x14xf32> to vector<14x2x14xf32>
    %195 = vector.broadcast %192 : f32 to vector<14x2x14xf32>
    %196 = arith.mulf %194, %195 : vector<14x2x14xf32>
    %197 = arith.addf %191, %196 : vector<14x2x14xf32>
    %c32 = arith.constant 32 : index
    %198 = memref.load %arg2[%c32] : memref<36xf32, #tpu.memory_space<smem>>
    %199 = vector.extract_strided_slice %3 {offsets = [3, 1, 0, 0], sizes = [1, 14, 2, 14], strides = [1, 1, 1, 1]} : vector<4x16x2x14xf32> to vector<1x14x2x14xf32>
    %200 = vector.shape_cast %199 : vector<1x14x2x14xf32> to vector<14x2x14xf32>
    %201 = vector.broadcast %198 : f32 to vector<14x2x14xf32>
    %202 = arith.mulf %200, %201 : vector<14x2x14xf32>
    %203 = arith.addf %197, %202 : vector<14x2x14xf32>
    %c33 = arith.constant 33 : index
    %204 = memref.load %arg2[%c33] : memref<36xf32, #tpu.memory_space<smem>>
    %205 = vector.extract_strided_slice %1 {offsets = [3, 2, 0, 0], sizes = [1, 14, 2, 14], strides = [1, 1, 1, 1]} : vector<4x16x2x14xf32> to vector<1x14x2x14xf32>
    %206 = vector.shape_cast %205 : vector<1x14x2x14xf32> to vector<14x2x14xf32>
    %207 = vector.broadcast %204 : f32 to vector<14x2x14xf32>
    %208 = arith.mulf %206, %207 : vector<14x2x14xf32>
    %209 = arith.addf %203, %208 : vector<14x2x14xf32>
    %c34 = arith.constant 34 : index
    %210 = memref.load %arg2[%c34] : memref<36xf32, #tpu.memory_space<smem>>
    %211 = vector.extract_strided_slice %2 {offsets = [3, 2, 0, 0], sizes = [1, 14, 2, 14], strides = [1, 1, 1, 1]} : vector<4x16x2x14xf32> to vector<1x14x2x14xf32>
    %212 = vector.shape_cast %211 : vector<1x14x2x14xf32> to vector<14x2x14xf32>
    %213 = vector.broadcast %210 : f32 to vector<14x2x14xf32>
    %214 = arith.mulf %212, %213 : vector<14x2x14xf32>
    %215 = arith.addf %209, %214 : vector<14x2x14xf32>
    %c35 = arith.constant 35 : index
    %216 = memref.load %arg2[%c35] : memref<36xf32, #tpu.memory_space<smem>>
    %217 = vector.extract_strided_slice %3 {offsets = [3, 2, 0, 0], sizes = [1, 14, 2, 14], strides = [1, 1, 1, 1]} : vector<4x16x2x14xf32> to vector<1x14x2x14xf32>
    %218 = vector.shape_cast %217 : vector<1x14x2x14xf32> to vector<14x2x14xf32>
    %219 = vector.broadcast %216 : f32 to vector<14x2x14xf32>
    %220 = arith.mulf %218, %219 : vector<14x2x14xf32>
    %221 = arith.addf %215, %220 : vector<14x2x14xf32>
    %cst = arith.constant 0.000000e+00 : f32
    %222 = vector.broadcast %cst : f32 to vector<14x2x14xf32>
    %223 = arith.maximumf %221, %222 : vector<14x2x14xf32>
    %c0_5 = arith.constant 0 : index
    %c0_6 = arith.constant 0 : index
    %c0_7 = arith.constant 0 : index
    %224 = vector.load %arg4[%c0_5, %c0_6, %c0_7] : memref<14x14x128xf32, #tpu.memory_space<vmem>>, vector<14x14x128xf32>
    %cst_8 = arith.constant dense<0.000000e+00> : vector<14x2x128xf32>
    %225 = tpu.matmul %223, %224, %cst_8 {dimension_numbers = #tpu.dot_dimension_numbers<[2], [1], [1], [2], [0, 0, 0, 1, 1, 2], [0], [0]>} : vector<14x2x14xf32>, vector<14x14x128xf32>, vector<14x2x128xf32> -> vector<14x2x128xf32>
    %c0_9 = arith.constant 0 : index
    %c0_10 = arith.constant 0 : index
    %226 = vector.load %arg5[%c0_9, %c0_10] : memref<1x128xf32, #tpu.memory_space<vmem>>, vector<1x128xf32>
    %cst_11 = arith.constant dense<0.000000e+00> : vector<2x128xf32>
    %227 = vector.multi_reduction <add>, %225, %cst_11 [0] : vector<14x2x128xf32> to vector<2x128xf32>
    %228 = vector.broadcast %226 : vector<1x128xf32> to vector<2x128xf32>
    %229 = arith.addf %228, %227 : vector<2x128xf32>
    %c0_12 = arith.constant 0 : index
    %c0_13 = arith.constant 0 : index
    %230 = vector.load %arg6[%c0_12, %c0_13] : memref<2x128xf32, #tpu.memory_space<vmem>>, vector<2x128xf32>
    tpu.vector_store %arg6[%c0_12, %c0_13], %229 {strides = array<i32>} : memref<2x128xf32, #tpu.memory_space<vmem>>, vector<2x128xf32>,
    return
  }
  func.func @transform_0(%arg0: i32) -> (i32, i32, i32, i32) {
    %c0_i32 = arith.constant 0 : i32
    %c0_i32_0 = arith.constant 0 : i32
    %c0_i32_1 = arith.constant 0 : i32
    %c0_i32_2 = arith.constant 0 : i32
    return %c0_i32, %c0_i32_0, %arg0, %c0_i32_1 : i32, i32, i32, i32
  }
  func.func @transform_1(%arg0: i32) -> i32 {
    %c0_i32 = arith.constant 0 : i32
    %c0_i32_0 = arith.constant 0 : i32
    return %c0_i32 : i32
  }
  func.func @transform_2(%arg0: i32) -> i32 {
    %c0_i32 = arith.constant 0 : i32
    %c0_i32_0 = arith.constant 0 : i32
    return %c0_i32 : i32
  }
  func.func @transform_3(%arg0: i32) -> (i32, i32, i32) {
    %c0_i32 = arith.constant 0 : i32
    %c0_i32_0 = arith.constant 0 : i32
    %c0_i32_1 = arith.constant 0 : i32
    %c0_i32_2 = arith.constant 0 : i32
    return %c0_i32, %c0_i32_0, %c0_i32_1 : i32, i32, i32
  }
  func.func @transform_4(%arg0: i32) -> (i32, i32) {
    %c0_i32 = arith.constant 0 : i32
    %c0_i32_0 = arith.constant 0 : i32
    %c0_i32_1 = arith.constant 0 : i32
    return %c0_i32, %c0_i32_0 : i32, i32
  }
  func.func @transform_5(%arg0: i32) -> (i32, i32) {
    %c0_i32 = arith.constant 0 : i32
    %c0_i32_0 = arith.constant 0 : i32
    return %arg0, %c0_i32 : i32, i32
  }
}

</mosaic_0001>

<llo_original>
// kernel: tpu_custom_call.1
$region0: #{tpu_custom_call.1}
  #allocation0 [shape = 'u32[]', space=smem, size = 0x4, offset = 0x4, fixed_abs, tag = 'smem constant byte address 0x4 - core index']
  #allocation1 [shape = 'u32[72,128]{1,0:T(1,128)}', space=vmem, size = 0x9000, scoped, tag = 'internal scratch']
  #allocation2 [shape = 'f32[1]{0:T(128)S(6)}', space=smem, size = 0x200, scoped, tag = 'scoped memory for tpu_custom_call.1']
  %s0 = inlined_call_operand.hbm [shape: f32[4,16,2,16], index: 0, kind: input, shape index: {}]
  %s1 = inlined_call_operand.vmem [shape: f32[36], index: 1, kind: input, shape index: {}]
  %s2 = inlined_call_operand.<no memory space> [shape: f32[1], index: 2, kind: input, shape index: {}]
  %s3 = inlined_call_operand.hbm [shape: f32[14,14,128], index: 3, kind: input, shape index: {}]
  %s4 = inlined_call_operand.vmem [shape: f32[1,128], index: 4, kind: input, shape index: {}]
  %s5 = inlined_call_operand.hbm [shape: f32[2,128], index: 5, kind: output, shape index: {}]
  %s6 = sld [smem:[#allocation0]]
  $region42: #{tpu_custom_call.1} parent=0
    _
  %s8 = ssub.s32 1, %s6
  %s9 = scalar_select 0, %s8, %s6
  %10 = sst [smem:[#allocation2]] %s2
  $region1: #{tpu_custom_call.1} parent=0
    #allocation3 [shape = 'u8[65536]{0}', space=vmem, size = 0x10000, scoped, tag = 'input window, operand 0, single buffered']
    #allocation4 [shape = 's32[1]{0}', space=sflag, size = 0x4, scoped, tag = 'scoped memory for tpu_custom_call.1']
    #allocation5 [shape = 's32[1]{0}', space=sflag, size = 0x4, scoped, tag = 'scoped memory for tpu_custom_call.1']
    #allocation6 [shape = 's32[1]{0}', space=sflag, size = 0x4, scoped, tag = 'scoped memory for tpu_custom_call.1']
    #allocation7 [shape = 'u8[512]{0}', space=smem, size = 0x200, scoped, tag = 'input window, operand 1, single buffered']
    #allocation8 [shape = 'u8[114688]{0}', space=vmem, size = 0x1c000, scoped, tag = 'input window, operand 3, single buffered']
    #allocation9 [shape = 's32[1]{0}', space=sflag, size = 0x4, scoped, tag = 'scoped memory for tpu_custom_call.1']
    #allocation10 [shape = 'u8[1024]{0}', space=vmem, size = 0x400, scoped, tag = 'output window, operand 0, single buffered']
    %11 = vsyncpa [#allocation4], 0
    %12 = vsyncpa [#allocation6], 0
    %13 = vsyncpa [#allocation9], 0
    %14 = vsyncpa [#allocation5], 0
    // Predicated region
    $region2: #{tpu_custom_call.1} parent=1 // pred_check
      _
    $region3: #{tpu_custom_call.1} parent=1 // pred_check_branch
      %16 = sbr.rel (0) target = $region5
    $region4: #{tpu_custom_call.1} parent=1 // pred_region
      %18 = vsyncadd [#allocation4], 0
      %s19 = sshll.u32 %s0, 4
      %s20 = int_to_ptr.hbm [resolvable:$true] %s19
      %s21 = sshll.u32 [#allocation3], 4
      %s22 = int_to_ptr.vmem [resolvable:$true] %s21
      %27 = dma.hbm_to_vmem [thread:$0]  %s20, 2048, %s22, [#allocation4], 32, 32, 2
    $region5: #{tpu_custom_call.1} parent=1 // pred_fallthru
      _
    // Predicated region
    $region6: #{tpu_custom_call.1} parent=1 // pred_check
      _
    $region7: #{tpu_custom_call.1} parent=1 // pred_check_branch
      %29 = sbr.rel (0) target = $region9
    $region8: #{tpu_custom_call.1} parent=1 // pred_region
      %31 = vsyncadd [#allocation6], 0
      %s33 = sshll.u32 %s1, 4
      %s34 = int_to_ptr.vmem [resolvable:$true] %s33
      %36 = dma.vmem_to_smem %s34, 16, [#allocation7], [#allocation6]
    $region9: #{tpu_custom_call.1} parent=1 // pred_fallthru
      _
    // Predicated region
    $region10: #{tpu_custom_call.1} parent=1 // pred_check
      _
    $region11: #{tpu_custom_call.1} parent=1 // pred_check_branch
      %38 = sbr.rel (0) target = $region13
    $region12: #{tpu_custom_call.1} parent=1 // pred_region
      _
    $region13: #{tpu_custom_call.1} parent=1 // pred_fallthru
      _
    // Predicated region
    $region14: #{tpu_custom_call.1} parent=1 // pred_check
      _
    $region15: #{tpu_custom_call.1} parent=1 // pred_check_branch
      %40 = sbr.rel (0) target = $region17
    $region16: #{tpu_custom_call.1} parent=1 // pred_region
      %42 = vsyncadd [#allocation9], 0
      %s43 = sshll.u32 %s3, 4
      %s44 = int_to_ptr.hbm [resolvable:$true] %s43
      %s45 = sshll.u32 [#allocation8], 4
      %s46 = int_to_ptr.vmem [resolvable:$true] %s45
      %51 = dma.hbm_to_vmem [thread:$0]  %s44, 3584, %s46, [#allocation9], 128, 128, 8
    $region17: #{tpu_custom_call.1} parent=1 // pred_fallthru
      _
    // Predicated region
    $region18: #{tpu_custom_call.1} parent=1 // pred_check
      _
    $region19: #{tpu_custom_call.1} parent=1 // pred_check_branch
      %53 = sbr.rel (0) target = $region21
    $region20: #{tpu_custom_call.1} parent=1 // pred_region
      _
    $region21: #{tpu_custom_call.1} parent=1 // pred_fallthru
      _
    // Predicated region
    $region22: #{tpu_custom_call.1} parent=1 // pred_check
      _
    $region23: #{tpu_custom_call.1} parent=1 // pred_check_branch
      %55 = sbr.rel (0) target = $region25
    $region24: #{tpu_custom_call.1} parent=1 // pred_region
      %57 = dma.done [#allocation4], 2048
    $region25: #{tpu_custom_call.1} parent=1 // pred_fallthru
      _
    // Predicated region
    $region26: #{tpu_custom_call.1} parent=1 // pred_check
      _
    $region27: #{tpu_custom_call.1} parent=1 // pred_check_branch
      %59 = sbr.rel (0) target = $region29
    $region28: #{tpu_custom_call.1} parent=1 // pred_region
      %61 = dma.done [#allocation6], 16
    $region29: #{tpu_custom_call.1} parent=1 // pred_fallthru
      _
    // Predicated region
    $region30: #{tpu_custom_call.1} parent=1 // pred_check
      _
    $region31: #{tpu_custom_call.1} parent=1 // pred_check_branch
      %63 = sbr.rel (0) target = $region33
    $region32: #{tpu_custom_call.1} parent=1 // pred_region
      %65 = dma.done [#allocation9], 3584
    $region33: #{tpu_custom_call.1} parent=1 // pred_fallthru
      _
    %66 = sfence
    %v67 = vld [vmem:[#allocation3] sm:$0x3]
    %v68 = vld [vmem:[#allocation3 + $0x2] sm:$0x3]
    %v69 = vld [vmem:[#allocation3 + $0x4] sm:$0x3]
    %v70 = vld [vmem:[#allocation3 + $0x6] sm:$0x3]
    %v71 = vld [vmem:[#allocation3 + $0x8] sm:$0x3]
    %v72 = vld [vmem:[#allocation3 + $0xa] sm:$0x3]
    %v73 = vld [vmem:[#allocation3 + $0xc] sm:$0x3]
    %v74 = vld [vmem:[#allocation3 + $0xe] sm:$0x3]
    %v75 = vld [vmem:[#allocation3 + $0x10] sm:$0x3]
    %v76 = vld [vmem:[#allocation3 + $0x12] sm:$0x3]
    %v77 = vld [vmem:[#allocation3 + $0x14] sm:$0x3]
    %v78 = vld [vmem:[#allocation3 + $0x16] sm:$0x3]
    %v79 = vld [vmem:[#allocation3 + $0x18] sm:$0x3]
    %v80 = vld [vmem:[#allocation3 + $0x1a] sm:$0x3]
    %v81 = vld [vmem:[#allocation3 + $0x1c] sm:$0x3]
    %v82 = vld [vmem:[#allocation3 + $0x1e] sm:$0x3]
    %v83 = vld [vmem:[#allocation3 + $0x20] sm:$0x3]
    %v84 = vld [vmem:[#allocation3 + $0x22] sm:$0x3]
    %v85 = vld [vmem:[#allocation3 + $0x24] sm:$0x3]
    %v86 = vld [vmem:[#allocation3 + $0x26] sm:$0x3]
    %v87 = vld [vmem:[#allocation3 + $0x28] sm:$0x3]
    %v88 = vld [vmem:[#allocation3 + $0x2a] sm:$0x3]
    %v89 = vld [vmem:[#allocation3 + $0x2c] sm:$0x3]
    %v90 = vld [vmem:[#allocation3 + $0x2e] sm:$0x3]
    %v91 = vld [vmem:[#allocation3 + $0x30] sm:$0x3]
    %v92 = vld [vmem:[#allocation3 + $0x32] sm:$0x3]
    %v93 = vld [vmem:[#allocation3 + $0x34] sm:$0x3]
    %v94 = vld [vmem:[#allocation3 + $0x36] sm:$0x3]
    %v95 = vld [vmem:[#allocation3 + $0x38] sm:$0x3]
    %v96 = vld [vmem:[#allocation3 + $0x3a] sm:$0x3]
    %v97 = vld [vmem:[#allocation3 + $0x3c] sm:$0x3]
    %v98 = vld [vmem:[#allocation3 + $0x3e] sm:$0x3]
    %v99 = vld [vmem:[#allocation3 + $0x40] sm:$0x3]
    %v100 = vld [vmem:[#allocation3 + $0x42] sm:$0x3]
    %v101 = vld [vmem:[#allocation3 + $0x44] sm:$0x3]
    %v102 = vld [vmem:[#allocation3 + $0x46] sm:$0x3]
    %v103 = vld [vmem:[#allocation3 + $0x48] sm:$0x3]
    %v104 = vld [vmem:[#allocation3 + $0x4a] sm:$0x3]
    %v105 = vld [vmem:[#allocation3 + $0x4c] sm:$0x3]
    %v106 = vld [vmem:[#allocation3 + $0x4e] sm:$0x3]
    %v107 = vld [vmem:[#allocation3 + $0x50] sm:$0x3]
    %v108 = vld [vmem:[#allocation3 + $0x52] sm:$0x3]
    %v109 = vld [vmem:[#allocation3 + $0x54] sm:$0x3]
    %v110 = vld [vmem:[#allocation3 + $0x56] sm:$0x3]
    %v111 = vld [vmem:[#allocation3 + $0x58] sm:$0x3]
    %v112 = vld [vmem:[#allocation3 + $0x5a] sm:$0x3]
    %v113 = vld [vmem:[#allocation3 + $0x5c] sm:$0x3]
    %v114 = vld [vmem:[#allocation3 + $0x5e] sm:$0x3]
    %v115 = vld [vmem:[#allocation3 + $0x60] sm:$0x3]
    %v116 = vld [vmem:[#allocation3 + $0x62] sm:$0x3]
    %v117 = vld [vmem:[#allocation3 + $0x64] sm:$0x3]
    %v118 = vld [vmem:[#allocation3 + $0x66] sm:$0x3]
    %v119 = vld [vmem:[#allocation3 + $0x68] sm:$0x3]
    %v120 = vld [vmem:[#allocation3 + $0x6a] sm:$0x3]
    %v121 = vld [vmem:[#allocation3 + $0x6c] sm:$0x3]
    %v122 = vld [vmem:[#allocation3 + $0x6e] sm:$0x3]
    %v123 = vld [vmem:[#allocation3 + $0x70] sm:$0x3]
    %v124 = vld [vmem:[#allocation3 + $0x72] sm:$0x3]
    %v125 = vld [vmem:[#allocation3 + $0x74] sm:$0x3]
    %v126 = vld [vmem:[#allocation3 + $0x76] sm:$0x3]
    %v127 = vld [vmem:[#allocation3 + $0x78] sm:$0x3]
    %v128 = vld [vmem:[#allocation3 + $0x7a] sm:$0x3]
    %v129 = vld [vmem:[#allocation3 + $0x7c] sm:$0x3]
    %v130 = vld [vmem:[#allocation3 + $0x7e] sm:$0x3]
    %s131 = sld [smem:[#allocation2]]
    %v132 = vstv %s131
    %s133 = sld [smem:[#allocation7]]
    %v134 = vstv %s133
    %v135 = vmul.f32 %v67, %v134
    %v136 = vmul.f32 %v68, %v134
    %v137 = vmul.f32 %v69, %v134
    %v138 = vmul.f32 %v70, %v134
    %v139 = vmul.f32 %v71, %v134
    %v140 = vmul.f32 %v72, %v134
    %v141 = vmul.f32 %v73, %v134
    %v142 = vmul.f32 %v74, %v134
    %v143 = vmul.f32 %v75, %v134
    %v144 = vmul.f32 %v76, %v134
    %v145 = vmul.f32 %v77, %v134
    %v146 = vmul.f32 %v78, %v134
    %v147 = vmul.f32 %v79, %v134
    %v148 = vmul.f32 %v80, %v134
    %v149 = vadd.f32 %v132, %v135
    %v150 = vadd.f32 %v132, %v136
    %v151 = vadd.f32 %v132, %v137
    %v152 = vadd.f32 %v132, %v138
    %v153 = vadd.f32 %v132, %v139
    %v154 = vadd.f32 %v132, %v140
    %v155 = vadd.f32 %v132, %v141
    %v156 = vadd.f32 %v132, %v142
    %v157 = vadd.f32 %v132, %v143
    %v158 = vadd.f32 %v132, %v144
    %v159 = vadd.f32 %v132, %v145
    %v160 = vadd.f32 %v132, %v146
    %v161 = vadd.f32 %v132, %v147
    %v162 = vadd.f32 %v132, %v148
    %s163 = sld [smem:[#allocation7 + $0x1]]
    %v164 = vstv %s163
    %v165 = vmul.f32 %v67, %v164
    %v166 = vmul.f32 %v68, %v164
    %v167 = vmul.f32 %v69, %v164
    %v168 = vmul.f32 %v70, %v164
    %v169 = vmul.f32 %v71, %v164
    %v170 = vmul.f32 %v72, %v164
    %v171 = vmul.f32 %v73, %v164
    %v172 = vmul.f32 %v74, %v164
    %v173 = vmul.f32 %v75, %v164
    %v174 = vmul.f32 %v76, %v164
    %v175 = vmul.f32 %v77, %v164
    %v176 = vmul.f32 %v78, %v164
    %v177 = vmul.f32 %v79, %v164
    %v178 = vmul.f32 %v80, %v164
    %193 = vrot.lane.b32.xlu0 %v165, 127
    %v194 = vpop.permute.xlu0 %193
    %195 = vrot.lane.b32.xlu0 %v166, 127
    %v196 = vpop.permute.xlu0 %195
    %197 = vrot.lane.b32.xlu0 %v167, 127
    %v198 = vpop.permute.xlu0 %197
    %199 = vrot.lane.b32.xlu0 %v168, 127
    %v200 = vpop.permute.xlu0 %199
    %201 = vrot.lane.b32.xlu0 %v169, 127
    %v202 = vpop.permute.xlu0 %201
    %203 = vrot.lane.b32.xlu0 %v170, 127
    %v204 = vpop.permute.xlu0 %203
    %205 = vrot.lane.b32.xlu0 %v171, 127
    %v206 = vpop.permute.xlu0 %205
    %207 = vrot.lane.b32.xlu0 %v172, 127
    %v208 = vpop.permute.xlu0 %207
    %209 = vrot.lane.b32.xlu0 %v173, 127
    %v210 = vpop.permute.xlu0 %209
    %211 = vrot.lane.b32.xlu0 %v174, 127
    %v212 = vpop.permute.xlu0 %211
    %213 = vrot.lane.b32.xlu0 %v175, 127
    %v214 = vpop.permute.xlu0 %213
    %215 = vrot.lane.b32.xlu0 %v176, 127
    %v216 = vpop.permute.xlu0 %215
    %217 = vrot.lane.b32.xlu0 %v177, 127
    %v218 = vpop.permute.xlu0 %217
    %219 = vrot.lane.b32.xlu0 %v178, 127
    %v220 = vpop.permute.xlu0 %219
    %v235 = vadd.f32 %v149, %v194
    %v236 = vadd.f32 %v150, %v196
    %v237 = vadd.f32 %v151, %v198
    %v238 = vadd.f32 %v152, %v200
    %v239 = vadd.f32 %v153, %v202
    %v240 = vadd.f32 %v154, %v204
    %v241 = vadd.f32 %v155, %v206
    %v242 = vadd.f32 %v156, %v208
    %v243 = vadd.f32 %v157, %v210
    %v244 = vadd.f32 %v158, %v212
    %v245 = vadd.f32 %v159, %v214
    %v246 = vadd.f32 %v160, %v216
    %v247 = vadd.f32 %v161, %v218
    %v248 = vadd.f32 %v162, %v220
    %s249 = sld [smem:[#allocation7 + $0x2]]
    %v250 = vstv %s249
    %v251 = vmul.f32 %v67, %v250
    %v252 = vmul.f32 %v68, %v250
    %v253 = vmul.f32 %v69, %v250
    %v254 = vmul.f32 %v70, %v250
    %v255 = vmul.f32 %v71, %v250
    %v256 = vmul.f32 %v72, %v250
    %v257 = vmul.f32 %v73, %v250
    %v258 = vmul.f32 %v74, %v250
    %v259 = vmul.f32 %v75, %v250
    %v260 = vmul.f32 %v76, %v250
    %v261 = vmul.f32 %v77, %v250
    %v262 = vmul.f32 %v78, %v250
    %v263 = vmul.f32 %v79, %v250
    %v264 = vmul.f32 %v80, %v250
    %279 = vrot.lane.b32.xlu0 %v251, 126
    %v280 = vpop.permute.xlu0 %279
    %281 = vrot.lane.b32.xlu0 %v252, 126
    %v282 = vpop.permute.xlu0 %281
    %283 = vrot.lane.b32.xlu0 %v253, 126
    %v284 = vpop.permute.xlu0 %283
    %285 = vrot.lane.b32.xlu0 %v254, 126
    %v286 = vpop.permute.xlu0 %285
    %287 = vrot.lane.b32.xlu0 %v255, 126
    %v288 = vpop.permute.xlu0 %287
    %289 = vrot.lane.b32.xlu0 %v256, 126
    %v290 = vpop.permute.xlu0 %289
    %291 = vrot.lane.b32.xlu0 %v257, 126
    %v292 = vpop.permute.xlu0 %291
    %293 = vrot.lane.b32.xlu0 %v258, 126
    %v294 = vpop.permute.xlu0 %293
    %295 = vrot.lane.b32.xlu0 %v259, 126
    %v296 = vpop.permute.xlu0 %295
    %297 = vrot.lane.b32.xlu0 %v260, 126
    %v298 = vpop.permute.xlu0 %297
    %299 = vrot.lane.b32.xlu0 %v261, 126
    %v300 = vpop.permute.xlu0 %299
    %301 = vrot.lane.b32.xlu0 %v262, 126
    %v302 = vpop.permute.xlu0 %301
    %303 = vrot.lane.b32.xlu0 %v263, 126
    %v304 = vpop.permute.xlu0 %303
    %305 = vrot.lane.b32.xlu0 %v264, 126
    %v306 = vpop.permute.xlu0 %305
    %v321 = vadd.f32 %v235, %v280
    %v322 = vadd.f32 %v236, %v282
    %v323 = vadd.f32 %v237, %v284
    %v324 = vadd.f32 %v238, %v286
    %v325 = vadd.f32 %v239, %v288
    %v326 = vadd.f32 %v240, %v290
    %v327 = vadd.f32 %v241, %v292
    %v328 = vadd.f32 %v242, %v294
    %v329 = vadd.f32 %v243, %v296
    %v330 = vadd.f32 %v244, %v298
    %v331 = vadd.f32 %v245, %v300
    %v332 = vadd.f32 %v246, %v302
    %v333 = vadd.f32 %v247, %v304
    %v334 = vadd.f32 %v248, %v306
    %s335 = sld [smem:[#allocation7 + $0x3]]
    %v336 = vstv %s335
    %v337 = vmul.f32 %v68, %v336
    %v338 = vmul.f32 %v69, %v336
    %v339 = vmul.f32 %v70, %v336
    %v340 = vmul.f32 %v71, %v336
    %v341 = vmul.f32 %v72, %v336
    %v342 = vmul.f32 %v73, %v336
    %v343 = vmul.f32 %v74, %v336
    %v344 = vmul.f32 %v75, %v336
    %v345 = vmul.f32 %v76, %v336
    %v346 = vmul.f32 %v77, %v336
    %v347 = vmul.f32 %v78, %v336
    %v348 = vmul.f32 %v79, %v336
    %v349 = vmul.f32 %v80, %v336
    %v350 = vmul.f32 %v81, %v336
    %v351 = vadd.f32 %v321, %v337
    %v352 = vadd.f32 %v322, %v338
    %v353 = vadd.f32 %v323, %v339
    %v354 = vadd.f32 %v324, %v340
    %v355 = vadd.f32 %v325, %v341
    %v356 = vadd.f32 %v326, %v342
    %v357 = vadd.f32 %v327, %v343
    %v358 = vadd.f32 %v328, %v344
    %v359 = vadd.f32 %v329, %v345
    %v360 = vadd.f32 %v330, %v346
    %v361 = vadd.f32 %v331, %v347
    %v362 = vadd.f32 %v332, %v348
    %v363 = vadd.f32 %v333, %v349
    %v364 = vadd.f32 %v334, %v350
    %s365 = sld [smem:[#allocation7 + $0x4]]
    %v366 = vstv %s365
    %v367 = vmul.f32 %v68, %v366
    %v368 = vmul.f32 %v69, %v366
    %v369 = vmul.f32 %v70, %v366
    %v370 = vmul.f32 %v71, %v366
    %v371 = vmul.f32 %v72, %v366
    %v372 = vmul.f32 %v73, %v366
    %v373 = vmul.f32 %v74, %v366
    %v374 = vmul.f32 %v75, %v366
    %v375 = vmul.f32 %v76, %v366
    %v376 = vmul.f32 %v77, %v366
    %v377 = vmul.f32 %v78, %v366
    %v378 = vmul.f32 %v79, %v366
    %v379 = vmul.f32 %v80, %v366
    %v380 = vmul.f32 %v81, %v366
    %395 = vrot.lane.b32.xlu0 %v367, 127
    %v396 = vpop.permute.xlu0 %395
    %397 = vrot.lane.b32.xlu0 %v368, 127
    %v398 = vpop.permute.xlu0 %397
    %399 = vrot.lane.b32.xlu0 %v369, 127
    %v400 = vpop.permute.xlu0 %399
    %401 = vrot.lane.b32.xlu0 %v370, 127
    %v402 = vpop.permute.xlu0 %401
    %403 = vrot.lane.b32.xlu0 %v371, 127
    %v404 = vpop.permute.xlu0 %403
    %405 = vrot.lane.b32.xlu0 %v372, 127
    %v406 = vpop.permute.xlu0 %405
    %407 = vrot.lane.b32.xlu0 %v373, 127
    %v408 = vpop.permute.xlu0 %407
    %409 = vrot.lane.b32.xlu0 %v374, 127
    %v410 = vpop.permute.xlu0 %409
    %411 = vrot.lane.b32.xlu0 %v375, 127
    %v412 = vpop.permute.xlu0 %411
    %413 = vrot.lane.b32.xlu0 %v376, 127
    %v414 = vpop.permute.xlu0 %413
    %415 = vrot.lane.b32.xlu0 %v377, 127
    %v416 = vpop.permute.xlu0 %415
    %417 = vrot.lane.b32.xlu0 %v378, 127
    %v418 = vpop.permute.xlu0 %417
    %419 = vrot.lane.b32.xlu0 %v379, 127
    %v420 = vpop.permute.xlu0 %419
    %421 = vrot.lane.b32.xlu0 %v380, 127
    %v422 = vpop.permute.xlu0 %421
    %v437 = vadd.f32 %v351, %v396
    %v438 = vadd.f32 %v352, %v398
    %v439 = vadd.f32 %v353, %v400
    %v440 = vadd.f32 %v354, %v402
    %v441 = vadd.f32 %v355, %v404
    %v442 = vadd.f32 %v356, %v406
    %v443 = vadd.f32 %v357, %v408
    %v444 = vadd.f32 %v358, %v410
    %v445 = vadd.f32 %v359, %v412
    %v446 = vadd.f32 %v360, %v414
    %v447 = vadd.f32 %v361, %v416
    %v448 = vadd.f32 %v362, %v418
    %v449 = vadd.f32 %v363, %v420
    %v450 = vadd.f32 %v364, %v422
    %s451 = sld [smem:[#allocation7 + $0x5]]
    %v452 = vstv %s451
    %v453 = vmul.f32 %v68, %v452
    %v454 = vmul.f32 %v69, %v452
    %v455 = vmul.f32 %v70, %v452
    %v456 = vmul.f32 %v71, %v452
    %v457 = vmul.f32 %v72, %v452
    %v458 = vmul.f32 %v73, %v452
    %v459 = vmul.f32 %v74, %v452
    %v460 = vmul.f32 %v75, %v452
    %v461 = vmul.f32 %v76, %v452
    %v462 = vmul.f32 %v77, %v452
    %v463 = vmul.f32 %v78, %v452
    %v464 = vmul.f32 %v79, %v452
    %v465 = vmul.f32 %v80, %v452
    %v466 = vmul.f32 %v81, %v452
    %481 = vrot.lane.b32.xlu0 %v453, 126
    %v482 = vpop.permute.xlu0 %481
    %483 = vrot.lane.b32.xlu0 %v454, 126
    %v484 = vpop.permute.xlu0 %483
    %485 = vrot.lane.b32.xlu0 %v455, 126
    %v486 = vpop.permute.xlu0 %485
    %487 = vrot.lane.b32.xlu0 %v456, 126
    %v488 = vpop.permute.xlu0 %487
    %489 = vrot.lane.b32.xlu0 %v457, 126
    %v490 = vpop.permute.xlu0 %489
    %491 = vrot.lane.b32.xlu0 %v458, 126
    %v492 = vpop.permute.xlu0 %491
    %493 = vrot.lane.b32.xlu0 %v459, 126
    %v494 = vpop.permute.xlu0 %493
    %495 = vrot.lane.b32.xlu0 %v460, 126
    %v496 = vpop.permute.xlu0 %495
    %497 = vrot.lane.b32.xlu0 %v461, 126
    %v498 = vpop.permute.xlu0 %497
    %499 = vrot.lane.b32.xlu0 %v462, 126
    %v500 = vpop.permute.xlu0 %499
    %501 = vrot.lane.b32.xlu0 %v463, 126
    %v502 = vpop.permute.xlu0 %501
    %503 = vrot.lane.b32.xlu0 %v464, 126
    %v504 = vpop.permute.xlu0 %503
    %505 = vrot.lane.b32.xlu0 %v465, 126
    %v506 = vpop.permute.xlu0 %505
    %507 = vrot.lane.b32.xlu0 %v466, 126
    %v508 = vpop.permute.xlu0 %507
    %v523 = vadd.f32 %v437, %v482
    %v524 = vadd.f32 %v438, %v484
    %v525 = vadd.f32 %v439, %v486
    %v526 = vadd.f32 %v440, %v488
    %v527 = vadd.f32 %v441, %v490
    %v528 = vadd.f32 %v442, %v492
    %v529 = vadd.f32 %v443, %v494
    %v530 = vadd.f32 %v444, %v496
    %v531 = vadd.f32 %v445, %v498
    %v532 = vadd.f32 %v446, %v500
    %v533 = vadd.f32 %v447, %v502
    %v534 = vadd.f32 %v448, %v504
    %v535 = vadd.f32 %v449, %v506
    %v536 = vadd.f32 %v450, %v508
    %s537 = sld [smem:[#allocation7 + $0x6]]
    %v538 = vstv %s537
    %v539 = vmul.f32 %v69, %v538
    %v540 = vmul.f32 %v70, %v538
    %v541 = vmul.f32 %v71, %v538
    %v542 = vmul.f32 %v72, %v538
    %v543 = vmul.f32 %v73, %v538
    %v544 = vmul.f32 %v74, %v538
    %v545 = vmul.f32 %v75, %v538
    %v546 = vmul.f32 %v76, %v538
    %v547 = vmul.f32 %v77, %v538
    %v548 = vmul.f32 %v78, %v538
    %v549 = vmul.f32 %v79, %v538
    %v550 = vmul.f32 %v80, %v538
    %v551 = vmul.f32 %v81, %v538
    %v552 = vmul.f32 %v82, %v538
    %v553 = vadd.f32 %v523, %v539
    %v554 = vadd.f32 %v524, %v540
    %v555 = vadd.f32 %v525, %v541
    %v556 = vadd.f32 %v526, %v542
    %v557 = vadd.f32 %v527, %v543
    %v558 = vadd.f32 %v528, %v544
    %v559 = vadd.f32 %v529, %v545
    %v560 = vadd.f32 %v530, %v546
    %v561 = vadd.f32 %v531, %v547
    %v562 = vadd.f32 %v532, %v548
    %v563 = vadd.f32 %v533, %v549
    %v564 = vadd.f32 %v534, %v550
    %v565 = vadd.f32 %v535, %v551
    %v566 = vadd.f32 %v536, %v552
    %s567 = sld [smem:[#allocation7 + $0x7]]
    %v568 = vstv %s567
    %v569 = vmul.f32 %v69, %v568
    %v570 = vmul.f32 %v70, %v568
    %v571 = vmul.f32 %v71, %v568
    %v572 = vmul.f32 %v72, %v568
    %v573 = vmul.f32 %v73, %v568
    %v574 = vmul.f32 %v74, %v568
    %v575 = vmul.f32 %v75, %v568
    %v576 = vmul.f32 %v76, %v568
    %v577 = vmul.f32 %v77, %v568
    %v578 = vmul.f32 %v78, %v568
    %v579 = vmul.f32 %v79, %v568
    %v580 = vmul.f32 %v80, %v568
    %v581 = vmul.f32 %v81, %v568
    %v582 = vmul.f32 %v82, %v568
    %597 = vrot.lane.b32.xlu0 %v569, 127
    %v598 = vpop.permute.xlu0 %597
    %599 = vrot.lane.b32.xlu0 %v570, 127
    %v600 = vpop.permute.xlu0 %599
    %601 = vrot.lane.b32.xlu0 %v571, 127
    %v602 = vpop.permute.xlu0 %601
    %603 = vrot.lane.b32.xlu0 %v572, 127
    %v604 = vpop.permute.xlu0 %603
    %605 = vrot.lane.b32.xlu0 %v573, 127
    %v606 = vpop.permute.xlu0 %605
    %607 = vrot.lane.b32.xlu0 %v574, 127
    %v608 = vpop.permute.xlu0 %607
    %609 = vrot.lane.b32.xlu0 %v575, 127
    %v610 = vpop.permute.xlu0 %609
    %611 = vrot.lane.b32.xlu0 %v576, 127
    %v612 = vpop.permute.xlu0 %611
    %613 = vrot.lane.b32.xlu0 %v577, 127
    %v614 = vpop.permute.xlu0 %613
    %615 = vrot.lane.b32.xlu0 %v578, 127
    %v616 = vpop.permute.xlu0 %615
    %617 = vrot.lane.b32.xlu0 %v579, 127
    %v618 = vpop.permute.xlu0 %617
    %619 = vrot.lane.b32.xlu0 %v580, 127
    %v620 = vpop.permute.xlu0 %619
    %621 = vrot.lane.b32.xlu0 %v581, 127
    %v622 = vpop.permute.xlu0 %621
    %623 = vrot.lane.b32.xlu0 %v582, 127
    %v624 = vpop.permute.xlu0 %623
    %v639 = vadd.f32 %v553, %v598
    %v640 = vadd.f32 %v554, %v600
    %v641 = vadd.f32 %v555, %v602
    %v642 = vadd.f32 %v556, %v604
    %v643 = vadd.f32 %v557, %v606
    %v644 = vadd.f32 %v558, %v608
    %v645 = vadd.f32 %v559, %v610
    %v646 = vadd.f32 %v560, %v612
    %v647 = vadd.f32 %v561, %v614
    %v648 = vadd.f32 %v562, %v616
    %v649 = vadd.f32 %v563, %v618
    %v650 = vadd.f32 %v564, %v620
    %v651 = vadd.f32 %v565, %v622
    %v652 = vadd.f32 %v566, %v624
    %s653 = sld [smem:[#allocation7 + $0x8]]
    %v654 = vstv %s653
    %v655 = vmul.f32 %v69, %v654
    %v656 = vmul.f32 %v70, %v654
    %v657 = vmul.f32 %v71, %v654
    %v658 = vmul.f32 %v72, %v654
    %v659 = vmul.f32 %v73, %v654
    %v660 = vmul.f32 %v74, %v654
    %v661 = vmul.f32 %v75, %v654
    %v662 = vmul.f32 %v76, %v654
    %v663 = vmul.f32 %v77, %v654
    %v664 = vmul.f32 %v78, %v654
    %v665 = vmul.f32 %v79, %v654
    %v666 = vmul.f32 %v80, %v654
    %v667 = vmul.f32 %v81, %v654
    %v668 = vmul.f32 %v82, %v654
    %683 = vrot.lane.b32.xlu0 %v655, 126
    %v684 = vpop.permute.xlu0 %683
    %685 = vrot.lane.b32.xlu0 %v656, 126
    %v686 = vpop.permute.xlu0 %685
    %687 = vrot.lane.b32.xlu0 %v657, 126
    %v688 = vpop.permute.xlu0 %687
    %689 = vrot.lane.b32.xlu0 %v658, 126
    %v690 = vpop.permute.xlu0 %689
    %691 = vrot.lane.b32.xlu0 %v659, 126
    %v692 = vpop.permute.xlu0 %691
    %693 = vrot.lane.b32.xlu0 %v660, 126
    %v694 = vpop.permute.xlu0 %693
    %695 = vrot.lane.b32.xlu0 %v661, 126
    %v696 = vpop.permute.xlu0 %695
    %697 = vrot.lane.b32.xlu0 %v662, 126
    %v698 = vpop.permute.xlu0 %697
    %699 = vrot.lane.b32.xlu0 %v663, 126
    %v700 = vpop.permute.xlu0 %699
    %701 = vrot.lane.b32.xlu0 %v664, 126
    %v702 = vpop.permute.xlu0 %701
    %703 = vrot.lane.b32.xlu0 %v665, 126
    %v704 = vpop.permute.xlu0 %703
    %705 = vrot.lane.b32.xlu0 %v666, 126
    %v706 = vpop.permute.xlu0 %705
    %707 = vrot.lane.b32.xlu0 %v667, 126
    %v708 = vpop.permute.xlu0 %707
    %709 = vrot.lane.b32.xlu0 %v668, 126
    %v710 = vpop.permute.xlu0 %709
    %v725 = vadd.f32 %v639, %v684
    %v726 = vadd.f32 %v640, %v686
    %v727 = vadd.f32 %v641, %v688
    %v728 = vadd.f32 %v642, %v690
    %v729 = vadd.f32 %v643, %v692
    %v730 = vadd.f32 %v644, %v694
    %v731 = vadd.f32 %v645, %v696
    %v732 = vadd.f32 %v646, %v698
    %v733 = vadd.f32 %v647, %v700
    %v734 = vadd.f32 %v648, %v702
    %v735 = vadd.f32 %v649, %v704
    %v736 = vadd.f32 %v650, %v706
    %v737 = vadd.f32 %v651, %v708
    %v738 = vadd.f32 %v652, %v710
    %s739 = sld [smem:[#allocation7 + $0x9]]
    %v740 = vstv %s739
    %v741 = vmul.f32 %v83, %v740
    %v742 = vmul.f32 %v84, %v740
    %v743 = vmul.f32 %v85, %v740
    %v744 = vmul.f32 %v86, %v740
    %v745 = vmul.f32 %v87, %v740
    %v746 = vmul.f32 %v88, %v740
    %v747 = vmul.f32 %v89, %v740
    %v748 = vmul.f32 %v90, %v740
    %v749 = vmul.f32 %v91, %v740
    %v750 = vmul.f32 %v92, %v740
    %v751 = vmul.f32 %v93, %v740
    %v752 = vmul.f32 %v94, %v740
    %v753 = vmul.f32 %v95, %v740
    %v754 = vmul.f32 %v96, %v740
    %v755 = vadd.f32 %v725, %v741
    %v756 = vadd.f32 %v726, %v742
    %v757 = vadd.f32 %v727, %v743
    %v758 = vadd.f32 %v728, %v744
    %v759 = vadd.f32 %v729, %v745
    %v760 = vadd.f32 %v730, %v746
    %v761 = vadd.f32 %v731, %v747
    %v762 = vadd.f32 %v732, %v748
    %v763 = vadd.f32 %v733, %v749
    %v764 = vadd.f32 %v734, %v750
    %v765 = vadd.f32 %v735, %v751
    %v766 = vadd.f32 %v736, %v752
    %v767 = vadd.f32 %v737, %v753
    %v768 = vadd.f32 %v738, %v754
    %s769 = sld [smem:[#allocation7 + $0xa]]
    %v770 = vstv %s769
    %v771 = vmul.f32 %v83, %v770
    %v772 = vmul.f32 %v84, %v770
    %v773 = vmul.f32 %v85, %v770
    %v774 = vmul.f32 %v86, %v770
    %v775 = vmul.f32 %v87, %v770
    %v776 = vmul.f32 %v88, %v770
    %v777 = vmul.f32 %v89, %v770
    %v778 = vmul.f32 %v90, %v770
    %v779 = vmul.f32 %v91, %v770
    %v780 = vmul.f32 %v92, %v770
    %v781 = vmul.f32 %v93, %v770
    %v782 = vmul.f32 %v94, %v770
    %v783 = vmul.f32 %v95, %v770
    %v784 = vmul.f32 %v96, %v770
    %799 = vrot.lane.b32.xlu0 %v771, 127
    %v800 = vpop.permute.xlu0 %799
    %801 = vrot.lane.b32.xlu0 %v772, 127
    %v802 = vpop.permute.xlu0 %801
    %803 = vrot.lane.b32.xlu0 %v773, 127
    %v804 = vpop.permute.xlu0 %803
    %805 = vrot.lane.b32.xlu0 %v774, 127
    %v806 = vpop.permute.xlu0 %805
    %807 = vrot.lane.b32.xlu0 %v775, 127
    %v808 = vpop.permute.xlu0 %807
    %809 = vrot.lane.b32.xlu0 %v776, 127
    %v810 = vpop.permute.xlu0 %809
    %811 = vrot.lane.b32.xlu0 %v777, 127
    %v812 = vpop.permute.xlu0 %811
    %813 = vrot.lane.b32.xlu0 %v778, 127
    %v814 = vpop.permute.xlu0 %813
    %815 = vrot.lane.b32.xlu0 %v779, 127
    %v816 = vpop.permute.xlu0 %815
    %817 = vrot.lane.b32.xlu0 %v780, 127
    %v818 = vpop.permute.xlu0 %817
    %819 = vrot.lane.b32.xlu0 %v781, 127
    %v820 = vpop.permute.xlu0 %819
    %821 = vrot.lane.b32.xlu0 %v782, 127
    %v822 = vpop.permute.xlu0 %821
    %823 = vrot.lane.b32.xlu0 %v783, 127
    %v824 = vpop.permute.xlu0 %823
    %825 = vrot.lane.b32.xlu0 %v784, 127
    %v826 = vpop.permute.xlu0 %825
    %v841 = vadd.f32 %v755, %v800
    %v842 = vadd.f32 %v756, %v802
    %v843 = vadd.f32 %v757, %v804
    %v844 = vadd.f32 %v758, %v806
    %v845 = vadd.f32 %v759, %v808
    %v846 = vadd.f32 %v760, %v810
    %v847 = vadd.f32 %v761, %v812
    %v848 = vadd.f32 %v762, %v814
    %v849 = vadd.f32 %v763, %v816
    %v850 = vadd.f32 %v764, %v818
    %v851 = vadd.f32 %v765, %v820
    %v852 = vadd.f32 %v766, %v822
    %v853 = vadd.f32 %v767, %v824
    %v854 = vadd.f32 %v768, %v826
    %s855 = sld [smem:[#allocation7 + $0xb]]
    %v856 = vstv %s855
    %v857 = vmul.f32 %v83, %v856
    %v858 = vmul.f32 %v84, %v856
    %v859 = vmul.f32 %v85, %v856
    %v860 = vmul.f32 %v86, %v856
    %v861 = vmul.f32 %v87, %v856
    %v862 = vmul.f32 %v88, %v856
    %v863 = vmul.f32 %v89, %v856
    %v864 = vmul.f32 %v90, %v856
    %v865 = vmul.f32 %v91, %v856
    %v866 = vmul.f32 %v92, %v856
    %v867 = vmul.f32 %v93, %v856
    %v868 = vmul.f32 %v94, %v856
    %v869 = vmul.f32 %v95, %v856
    %v870 = vmul.f32 %v96, %v856
    %885 = vrot.lane.b32.xlu0 %v857, 126
    %v886 = vpop.permute.xlu0 %885
    %887 = vrot.lane.b32.xlu0 %v858, 126
    %v888 = vpop.permute.xlu0 %887
    %889 = vrot.lane.b32.xlu0 %v859, 126
    %v890 = vpop.permute.xlu0 %889
    %891 = vrot.lane.b32.xlu0 %v860, 126
    %v892 = vpop.permute.xlu0 %891
    %893 = vrot.lane.b32.xlu0 %v861, 126
    %v894 = vpop.permute.xlu0 %893
    %895 = vrot.lane.b32.xlu0 %v862, 126
    %v896 = vpop.permute.xlu0 %895
    %897 = vrot.lane.b32.xlu0 %v863, 126
    %v898 = vpop.permute.xlu0 %897
    %899 = vrot.lane.b32.xlu0 %v864, 126
    %v900 = vpop.permute.xlu0 %899
    %901 = vrot.lane.b32.xlu0 %v865, 126
    %v902 = vpop.permute.xlu0 %901
    %903 = vrot.lane.b32.xlu0 %v866, 126
    %v904 = vpop.permute.xlu0 %903
    %905 = vrot.lane.b32.xlu0 %v867, 126
    %v906 = vpop.permute.xlu0 %905
    %907 = vrot.lane.b32.xlu0 %v868, 126
    %v908 = vpop.permute.xlu0 %907
    %909 = vrot.lane.b32.xlu0 %v869, 126
    %v910 = vpop.permute.xlu0 %909
    %911 = vrot.lane.b32.xlu0 %v870, 126
    %v912 = vpop.permute.xlu0 %911
    %v927 = vadd.f32 %v841, %v886
    %v928 = vadd.f32 %v842, %v888
    %v929 = vadd.f32 %v843, %v890
    %v930 = vadd.f32 %v844, %v892
    %v931 = vadd.f32 %v845, %v894
    %v932 = vadd.f32 %v846, %v896
    %v933 = vadd.f32 %v847, %v898
    %v934 = vadd.f32 %v848, %v900
    %v935 = vadd.f32 %v849, %v902
    %v936 = vadd.f32 %v850, %v904
    %v937 = vadd.f32 %v851, %v906
    %v938 = vadd.f32 %v852, %v908
    %v939 = vadd.f32 %v853, %v910
    %v940 = vadd.f32 %v854, %v912
    %s941 = sld [smem:[#allocation7 + $0xc]]
    %v942 = vstv %s941
    %v943 = vmul.f32 %v84, %v942
    %v944 = vmul.f32 %v85, %v942
    %v945 = vmul.f32 %v86, %v942
    %v946 = vmul.f32 %v87, %v942
    %v947 = vmul.f32 %v88, %v942
    %v948 = vmul.f32 %v89, %v942
    %v949 = vmul.f32 %v90, %v942
    %v950 = vmul.f32 %v91, %v942
    %v951 = vmul.f32 %v92, %v942
    %v952 = vmul.f32 %v93, %v942
    %v953 = vmul.f32 %v94, %v942
    %v954 = vmul.f32 %v95, %v942
    %v955 = vmul.f32 %v96, %v942
    %v956 = vmul.f32 %v97, %v942
    %v957 = vadd.f32 %v927, %v943
    %v958 = vadd.f32 %v928, %v944
    %v959 = vadd.f32 %v929, %v945
    %v960 = vadd.f32 %v930, %v946
    %v961 = vadd.f32 %v931, %v947
    %v962 = vadd.f32 %v932, %v948
    %v963 = vadd.f32 %v933, %v949
    %v964 = vadd.f32 %v934, %v950
    %v965 = vadd.f32 %v935, %v951
    %v966 = vadd.f32 %v936, %v952
    %v967 = vadd.f32 %v937, %v953
    %v968 = vadd.f32 %v938, %v954
    %v969 = vadd.f32 %v939, %v955
    %v970 = vadd.f32 %v940, %v956
    %s971 = sld [smem:[#allocation7 + $0xd]]
    %v972 = vstv %s971
    %v973 = vmul.f32 %v84, %v972
    %v974 = vmul.f32 %v85, %v972
    %v975 = vmul.f32 %v86, %v972
    %v976 = vmul.f32 %v87, %v972
    %v977 = vmul.f32 %v88, %v972
    %v978 = vmul.f32 %v89, %v972
    %v979 = vmul.f32 %v90, %v972
    %v980 = vmul.f32 %v91, %v972
    %v981 = vmul.f32 %v92, %v972
    %v982 = vmul.f32 %v93, %v972
    %v983 = vmul.f32 %v94, %v972
    %v984 = vmul.f32 %v95, %v972
    %v985 = vmul.f32 %v96, %v972
    %v986 = vmul.f32 %v97, %v972
    %1001 = vrot.lane.b32.xlu0 %v973, 127
    %v1002 = vpop.permute.xlu0 %1001
    %1003 = vrot.lane.b32.xlu0 %v974, 127
    %v1004 = vpop.permute.xlu0 %1003
    %1005 = vrot.lane.b32.xlu0 %v975, 127
    %v1006 = vpop.permute.xlu0 %1005
    %1007 = vrot.lane.b32.xlu0 %v976, 127
    %v1008 = vpop.permute.xlu0 %1007
    %1009 = vrot.lane.b32.xlu0 %v977, 127
    %v1010 = vpop.permute.xlu0 %1009
    %1011 = vrot.lane.b32.xlu0 %v978, 127
    %v1012 = vpop.permute.xlu0 %1011
    %1013 = vrot.lane.b32.xlu0 %v979, 127
    %v1014 = vpop.permute.xlu0 %1013
    %1015 = vrot.lane.b32.xlu0 %v980, 127
    %v1016 = vpop.permute.xlu0 %1015
    %1017 = vrot.lane.b32.xlu0 %v981, 127
    %v1018 = vpop.permute.xlu0 %1017
    %1019 = vrot.lane.b32.xlu0 %v982, 127
    %v1020 = vpop.permute.xlu0 %1019
    %1021 = vrot.lane.b32.xlu0 %v983, 127
    %v1022 = vpop.permute.xlu0 %1021
    %1023 = vrot.lane.b32.xlu0 %v984, 127
    %v1024 = vpop.permute.xlu0 %1023
    %1025 = vrot.lane.b32.xlu0 %v985, 127
    %v1026 = vpop.permute.xlu0 %1025
    %1027 = vrot.lane.b32.xlu0 %v986, 127
    %v1028 = vpop.permute.xlu0 %1027
    %v1043 = vadd.f32 %v957, %v1002
    %v1044 = vadd.f32 %v958, %v1004
    %v1045 = vadd.f32 %v959, %v1006
    %v1046 = vadd.f32 %v960, %v1008
    %v1047 = vadd.f32 %v961, %v1010
    %v1048 = vadd.f32 %v962, %v1012
    %v1049 = vadd.f32 %v963, %v1014
    %v1050 = vadd.f32 %v964, %v1016
    %v1051 = vadd.f32 %v965, %v1018
    %v1052 = vadd.f32 %v966, %v1020
    %v1053 = vadd.f32 %v967, %v1022
    %v1054 = vadd.f32 %v968, %v1024
    %v1055 = vadd.f32 %v969, %v1026
    %v1056 = vadd.f32 %v970, %v1028
    %s1057 = sld [smem:[#allocation7 + $0xe]]
    %v1058 = vstv %s1057
    %v1059 = vmul.f32 %v84, %v1058
    %v1060 = vmul.f32 %v85, %v1058
    %v1061 = vmul.f32 %v86, %v1058
    %v1062 = vmul.f32 %v87, %v1058
    %v1063 = vmul.f32 %v88, %v1058
    %v1064 = vmul.f32 %v89, %v1058
    %v1065 = vmul.f32 %v90, %v1058
    %v1066 = vmul.f32 %v91, %v1058
    %v1067 = vmul.f32 %v92, %v1058
    %v1068 = vmul.f32 %v93, %v1058
    %v1069 = vmul.f32 %v94, %v1058
    %v1070 = vmul.f32 %v95, %v1058
    %v1071 = vmul.f32 %v96, %v1058
    %v1072 = vmul.f32 %v97, %v1058
    %1087 = vrot.lane.b32.xlu0 %v1059, 126
    %v1088 = vpop.permute.xlu0 %1087
    %1089 = vrot.lane.b32.xlu0 %v1060, 126
    %v1090 = vpop.permute.xlu0 %1089
    %1091 = vrot.lane.b32.xlu0 %v1061, 126
    %v1092 = vpop.permute.xlu0 %1091
    %1093 = vrot.lane.b32.xlu0 %v1062, 126
    %v1094 = vpop.permute.xlu0 %1093
    %1095 = vrot.lane.b32.xlu0 %v1063, 126
    %v1096 = vpop.permute.xlu0 %1095
    %1097 = vrot.lane.b32.xlu0 %v1064, 126
    %v1098 = vpop.permute.xlu0 %1097
    %1099 = vrot.lane.b32.xlu0 %v1065, 126
    %v1100 = vpop.permute.xlu0 %1099
    %1101 = vrot.lane.b32.xlu0 %v1066, 126
    %v1102 = vpop.permute.xlu0 %1101
    %1103 = vrot.lane.b32.xlu0 %v1067, 126
    %v1104 = vpop.permute.xlu0 %1103
    %1105 = vrot.lane.b32.xlu0 %v1068, 126
    %v1106 = vpop.permute.xlu0 %1105
    %1107 = vrot.lane.b32.xlu0 %v1069, 126
    %v1108 = vpop.permute.xlu0 %1107
    %1109 = vrot.lane.b32.xlu0 %v1070, 126
    %v1110 = vpop.permute.xlu0 %1109
    %1111 = vrot.lane.b32.xlu0 %v1071, 126
    %v1112 = vpop.permute.xlu0 %1111
    %1113 = vrot.lane.b32.xlu0 %v1072, 126
    %v1114 = vpop.permute.xlu0 %1113
    %v1129 = vadd.f32 %v1043, %v1088
    %v1130 = vadd.f32 %v1044, %v1090
    %v1131 = vadd.f32 %v1045, %v1092
    %v1132 = vadd.f32 %v1046, %v1094
    %v1133 = vadd.f32 %v1047, %v1096
    %v1134 = vadd.f32 %v1048, %v1098
    %v1135 = vadd.f32 %v1049, %v1100
    %v1136 = vadd.f32 %v1050, %v1102
    %v1137 = vadd.f32 %v1051, %v1104
    %v1138 = vadd.f32 %v1052, %v1106
    %v1139 = vadd.f32 %v1053, %v1108
    %v1140 = vadd.f32 %v1054, %v1110
    %v1141 = vadd.f32 %v1055, %v1112
    %v1142 = vadd.f32 %v1056, %v1114
    %s1143 = sld [smem:[#allocation7 + $0xf]]
    %v1144 = vstv %s1143
    %v1145 = vmul.f32 %v85, %v1144
    %v1146 = vmul.f32 %v86, %v1144
    %v1147 = vmul.f32 %v87, %v1144
    %v1148 = vmul.f32 %v88, %v1144
    %v1149 = vmul.f32 %v89, %v1144
    %v1150 = vmul.f32 %v90, %v1144
    %v1151 = vmul.f32 %v91, %v1144
    %v1152 = vmul.f32 %v92, %v1144
    %v1153 = vmul.f32 %v93, %v1144
    %v1154 = vmul.f32 %v94, %v1144
    %v1155 = vmul.f32 %v95, %v1144
    %v1156 = vmul.f32 %v96, %v1144
    %v1157 = vmul.f32 %v97, %v1144
    %v1158 = vmul.f32 %v98, %v1144
    %v1159 = vadd.f32 %v1129, %v1145
    %v1160 = vadd.f32 %v1130, %v1146
    %v1161 = vadd.f32 %v1131, %v1147
    %v1162 = vadd.f32 %v1132, %v1148
    %v1163 = vadd.f32 %v1133, %v1149
    %v1164 = vadd.f32 %v1134, %v1150
    %v1165 = vadd.f32 %v1135, %v1151
    %v1166 = vadd.f32 %v1136, %v1152
    %v1167 = vadd.f32 %v1137, %v1153
    %v1168 = vadd.f32 %v1138, %v1154
    %v1169 = vadd.f32 %v1139, %v1155
    %v1170 = vadd.f32 %v1140, %v1156
    %v1171 = vadd.f32 %v1141, %v1157
    %v1172 = vadd.f32 %v1142, %v1158
    %s1173 = sld [smem:[#allocation7 + $0x10]]
    %v1174 = vstv %s1173
    %v1175 = vmul.f32 %v85, %v1174
    %v1176 = vmul.f32 %v86, %v1174
    %v1177 = vmul.f32 %v87, %v1174
    %v1178 = vmul.f32 %v88, %v1174
    %v1179 = vmul.f32 %v89, %v1174
    %v1180 = vmul.f32 %v90, %v1174
    %v1181 = vmul.f32 %v91, %v1174
    %v1182 = vmul.f32 %v92, %v1174
    %v1183 = vmul.f32 %v93, %v1174
    %v1184 = vmul.f32 %v94, %v1174
    %v1185 = vmul.f32 %v95, %v1174
    %v1186 = vmul.f32 %v96, %v1174
    %v1187 = vmul.f32 %v97, %v1174
    %v1188 = vmul.f32 %v98, %v1174
    %1203 = vrot.lane.b32.xlu0 %v1175, 127
    %v1204 = vpop.permute.xlu0 %1203
    %1205 = vrot.lane.b32.xlu0 %v1176, 127
    %v1206 = vpop.permute.xlu0 %1205
    %1207 = vrot.lane.b32.xlu0 %v1177, 127
    %v1208 = vpop.permute.xlu0 %1207
    %1209 = vrot.lane.b32.xlu0 %v1178, 127
    %v1210 = vpop.permute.xlu0 %1209
    %1211 = vrot.lane.b32.xlu0 %v1179, 127
    %v1212 = vpop.permute.xlu0 %1211
    %1213 = vrot.lane.b32.xlu0 %v1180, 127
    %v1214 = vpop.permute.xlu0 %1213
    %1215 = vrot.lane.b32.xlu0 %v1181, 127
    %v1216 = vpop.permute.xlu0 %1215
    %1217 = vrot.lane.b32.xlu0 %v1182, 127
    %v1218 = vpop.permute.xlu0 %1217
    %1219 = vrot.lane.b32.xlu0 %v1183, 127
    %v1220 = vpop.permute.xlu0 %1219
    %1221 = vrot.lane.b32.xlu0 %v1184, 127
    %v1222 = vpop.permute.xlu0 %1221
    %1223 = vrot.lane.b32.xlu0 %v1185, 127
    %v1224 = vpop.permute.xlu0 %1223
    %1225 = vrot.lane.b32.xlu0 %v1186, 127
    %v1226 = vpop.permute.xlu0 %1225
    %1227 = vrot.lane.b32.xlu0 %v1187, 127
    %v1228 = vpop.permute.xlu0 %1227
    %1229 = vrot.lane.b32.xlu0 %v1188, 127
    %v1230 = vpop.permute.xlu0 %1229
    %v1245 = vadd.f32 %v1159, %v1204
    %v1246 = vadd.f32 %v1160, %v1206
    %v1247 = vadd.f32 %v1161, %v1208
    %v1248 = vadd.f32 %v1162, %v1210
    %v1249 = vadd.f32 %v1163, %v1212
    %v1250 = vadd.f32 %v1164, %v1214
    %v1251 = vadd.f32 %v1165, %v1216
    %v1252 = vadd.f32 %v1166, %v1218
    %v1253 = vadd.f32 %v1167, %v1220
    %v1254 = vadd.f32 %v1168, %v1222
    %v1255 = vadd.f32 %v1169, %v1224
    %v1256 = vadd.f32 %v1170, %v1226
    %v1257 = vadd.f32 %v1171, %v1228
    %v1258 = vadd.f32 %v1172, %v1230
    %s1259 = sld [smem:[#allocation7 + $0x11]]
    %v1260 = vstv %s1259
    %v1261 = vmul.f32 %v85, %v1260
    %v1262 = vmul.f32 %v86, %v1260
    %v1263 = vmul.f32 %v87, %v1260
    %v1264 = vmul.f32 %v88, %v1260
    %v1265 = vmul.f32 %v89, %v1260
    %v1266 = vmul.f32 %v90, %v1260
    %v1267 = vmul.f32 %v91, %v1260
    %v1268 = vmul.f32 %v92, %v1260
    %v1269 = vmul.f32 %v93, %v1260
    %v1270 = vmul.f32 %v94, %v1260
    %v1271 = vmul.f32 %v95, %v1260
    %v1272 = vmul.f32 %v96, %v1260
    %v1273 = vmul.f32 %v97, %v1260
    %v1274 = vmul.f32 %v98, %v1260
    %1289 = vrot.lane.b32.xlu0 %v1261, 126
    %v1290 = vpop.permute.xlu0 %1289
    %1291 = vrot.lane.b32.xlu0 %v1262, 126
    %v1292 = vpop.permute.xlu0 %1291
    %1293 = vrot.lane.b32.xlu0 %v1263, 126
    %v1294 = vpop.permute.xlu0 %1293
    %1295 = vrot.lane.b32.xlu0 %v1264, 126
    %v1296 = vpop.permute.xlu0 %1295
    %1297 = vrot.lane.b32.xlu0 %v1265, 126
    %v1298 = vpop.permute.xlu0 %1297
    %1299 = vrot.lane.b32.xlu0 %v1266, 126
    %v1300 = vpop.permute.xlu0 %1299
    %1301 = vrot.lane.b32.xlu0 %v1267, 126
    %v1302 = vpop.permute.xlu0 %1301
    %1303 = vrot.lane.b32.xlu0 %v1268, 126
    %v1304 = vpop.permute.xlu0 %1303
    %1305 = vrot.lane.b32.xlu0 %v1269, 126
    %v1306 = vpop.permute.xlu0 %1305
    %1307 = vrot.lane.b32.xlu0 %v1270, 126
    %v1308 = vpop.permute.xlu0 %1307
    %1309 = vrot.lane.b32.xlu0 %v1271, 126
    %v1310 = vpop.permute.xlu0 %1309
    %1311 = vrot.lane.b32.xlu0 %v1272, 126
    %v1312 = vpop.permute.xlu0 %1311
    %1313 = vrot.lane.b32.xlu0 %v1273, 126
    %v1314 = vpop.permute.xlu0 %1313
    %1315 = vrot.lane.b32.xlu0 %v1274, 126
    %v1316 = vpop.permute.xlu0 %1315
    %v1331 = vadd.f32 %v1245, %v1290
    %v1332 = vadd.f32 %v1246, %v1292
    %v1333 = vadd.f32 %v1247, %v1294
    %v1334 = vadd.f32 %v1248, %v1296
    %v1335 = vadd.f32 %v1249, %v1298
    %v1336 = vadd.f32 %v1250, %v1300
    %v1337 = vadd.f32 %v1251, %v1302
    %v1338 = vadd.f32 %v1252, %v1304
    %v1339 = vadd.f32 %v1253, %v1306
    %v1340 = vadd.f32 %v1254, %v1308
    %v1341 = vadd.f32 %v1255, %v1310
    %v1342 = vadd.f32 %v1256, %v1312
    %v1343 = vadd.f32 %v1257, %v1314
    %v1344 = vadd.f32 %v1258, %v1316
    %s1345 = sld [smem:[#allocation7 + $0x12]]
    %v1346 = vstv %s1345
    %v1347 = vmul.f32 %v99, %v1346
    %v1348 = vmul.f32 %v100, %v1346
    %v1349 = vmul.f32 %v101, %v1346
    %v1350 = vmul.f32 %v102, %v1346
    %v1351 = vmul.f32 %v103, %v1346
    %v1352 = vmul.f32 %v104, %v1346
    %v1353 = vmul.f32 %v105, %v1346
    %v1354 = vmul.f32 %v106, %v1346
    %v1355 = vmul.f32 %v107, %v1346
    %v1356 = vmul.f32 %v108, %v1346
    %v1357 = vmul.f32 %v109, %v1346
    %v1358 = vmul.f32 %v110, %v1346
    %v1359 = vmul.f32 %v111, %v1346
    %v1360 = vmul.f32 %v112, %v1346
    %v1361 = vadd.f32 %v1331, %v1347
    %v1362 = vadd.f32 %v1332, %v1348
    %v1363 = vadd.f32 %v1333, %v1349
    %v1364 = vadd.f32 %v1334, %v1350
    %v1365 = vadd.f32 %v1335, %v1351
    %v1366 = vadd.f32 %v1336, %v1352
    %v1367 = vadd.f32 %v1337, %v1353
    %v1368 = vadd.f32 %v1338, %v1354
    %v1369 = vadd.f32 %v1339, %v1355
    %v1370 = vadd.f32 %v1340, %v1356
    %v1371 = vadd.f32 %v1341, %v1357
    %v1372 = vadd.f32 %v1342, %v1358
    %v1373 = vadd.f32 %v1343, %v1359
    %v1374 = vadd.f32 %v1344, %v1360
    %s1375 = sld [smem:[#allocation7 + $0x13]]
    %v1376 = vstv %s1375
    %v1377 = vmul.f32 %v99, %v1376
    %v1378 = vmul.f32 %v100, %v1376
    %v1379 = vmul.f32 %v101, %v1376
    %v1380 = vmul.f32 %v102, %v1376
    %v1381 = vmul.f32 %v103, %v1376
    %v1382 = vmul.f32 %v104, %v1376
    %v1383 = vmul.f32 %v105, %v1376
    %v1384 = vmul.f32 %v106, %v1376
    %v1385 = vmul.f32 %v107, %v1376
    %v1386 = vmul.f32 %v108, %v1376
    %v1387 = vmul.f32 %v109, %v1376
    %v1388 = vmul.f32 %v110, %v1376
    %v1389 = vmul.f32 %v111, %v1376
    %v1390 = vmul.f32 %v112, %v1376
    %1405 = vrot.lane.b32.xlu0 %v1377, 127
    %v1406 = vpop.permute.xlu0 %1405
    %1407 = vrot.lane.b32.xlu0 %v1378, 127
    %v1408 = vpop.permute.xlu0 %1407
    %1409 = vrot.lane.b32.xlu0 %v1379, 127
    %v1410 = vpop.permute.xlu0 %1409
    %1411 = vrot.lane.b32.xlu0 %v1380, 127
    %v1412 = vpop.permute.xlu0 %1411
    %1413 = vrot.lane.b32.xlu0 %v1381, 127
    %v1414 = vpop.permute.xlu0 %1413
    %1415 = vrot.lane.b32.xlu0 %v1382, 127
    %v1416 = vpop.permute.xlu0 %1415
    %1417 = vrot.lane.b32.xlu0 %v1383, 127
    %v1418 = vpop.permute.xlu0 %1417
    %1419 = vrot.lane.b32.xlu0 %v1384, 127
    %v1420 = vpop.permute.xlu0 %1419
    %1421 = vrot.lane.b32.xlu0 %v1385, 127
    %v1422 = vpop.permute.xlu0 %1421
    %1423 = vrot.lane.b32.xlu0 %v1386, 127
    %v1424 = vpop.permute.xlu0 %1423
    %1425 = vrot.lane.b32.xlu0 %v1387, 127
    %v1426 = vpop.permute.xlu0 %1425
    %1427 = vrot.lane.b32.xlu0 %v1388, 127
    %v1428 = vpop.permute.xlu0 %1427
    %1429 = vrot.lane.b32.xlu0 %v1389, 127
    %v1430 = vpop.permute.xlu0 %1429
    %1431 = vrot.lane.b32.xlu0 %v1390, 127
    %v1432 = vpop.permute.xlu0 %1431
    %v1447 = vadd.f32 %v1361, %v1406
    %v1448 = vadd.f32 %v1362, %v1408
    %v1449 = vadd.f32 %v1363, %v1410
    %v1450 = vadd.f32 %v1364, %v1412
    %v1451 = vadd.f32 %v1365, %v1414
    %v1452 = vadd.f32 %v1366, %v1416
    %v1453 = vadd.f32 %v1367, %v1418
    %v1454 = vadd.f32 %v1368, %v1420
    %v1455 = vadd.f32 %v1369, %v1422
    %v1456 = vadd.f32 %v1370, %v1424
    %v1457 = vadd.f32 %v1371, %v1426
    %v1458 = vadd.f32 %v1372, %v1428
    %v1459 = vadd.f32 %v1373, %v1430
    %v1460 = vadd.f32 %v1374, %v1432
    %s1461 = sld [smem:[#allocation7 + $0x14]]
    %v1462 = vstv %s1461
    %v1463 = vmul.f32 %v99, %v1462
    %v1464 = vmul.f32 %v100, %v1462
    %v1465 = vmul.f32 %v101, %v1462
    %v1466 = vmul.f32 %v102, %v1462
    %v1467 = vmul.f32 %v103, %v1462
    %v1468 = vmul.f32 %v104, %v1462
    %v1469 = vmul.f32 %v105, %v1462
    %v1470 = vmul.f32 %v106, %v1462
    %v1471 = vmul.f32 %v107, %v1462
    %v1472 = vmul.f32 %v108, %v1462
    %v1473 = vmul.f32 %v109, %v1462
    %v1474 = vmul.f32 %v110, %v1462
    %v1475 = vmul.f32 %v111, %v1462
    %v1476 = vmul.f32 %v112, %v1462
    %1491 = vrot.lane.b32.xlu0 %v1463, 126
    %v1492 = vpop.permute.xlu0 %1491
    %1493 = vrot.lane.b32.xlu0 %v1464, 126
    %v1494 = vpop.permute.xlu0 %1493
    %1495 = vrot.lane.b32.xlu0 %v1465, 126
    %v1496 = vpop.permute.xlu0 %1495
    %1497 = vrot.lane.b32.xlu0 %v1466, 126
    %v1498 = vpop.permute.xlu0 %1497
    %1499 = vrot.lane.b32.xlu0 %v1467, 126
    %v1500 = vpop.permute.xlu0 %1499
    %1501 = vrot.lane.b32.xlu0 %v1468, 126
    %v1502 = vpop.permute.xlu0 %1501
    %1503 = vrot.lane.b32.xlu0 %v1469, 126
    %v1504 = vpop.permute.xlu0 %1503
    %1505 = vrot.lane.b32.xlu0 %v1470, 126
    %v1506 = vpop.permute.xlu0 %1505
    %1507 = vrot.lane.b32.xlu0 %v1471, 126
    %v1508 = vpop.permute.xlu0 %1507
    %1509 = vrot.lane.b32.xlu0 %v1472, 126
    %v1510 = vpop.permute.xlu0 %1509
    %1511 = vrot.lane.b32.xlu0 %v1473, 126
    %v1512 = vpop.permute.xlu0 %1511
    %1513 = vrot.lane.b32.xlu0 %v1474, 126
    %v1514 = vpop.permute.xlu0 %1513
    %1515 = vrot.lane.b32.xlu0 %v1475, 126
    %v1516 = vpop.permute.xlu0 %1515
    %1517 = vrot.lane.b32.xlu0 %v1476, 126
    %v1518 = vpop.permute.xlu0 %1517
    %v1533 = vadd.f32 %v1447, %v1492
    %v1534 = vadd.f32 %v1448, %v1494
    %v1535 = vadd.f32 %v1449, %v1496
    %v1536 = vadd.f32 %v1450, %v1498
    %v1537 = vadd.f32 %v1451, %v1500
    %v1538 = vadd.f32 %v1452, %v1502
    %v1539 = vadd.f32 %v1453, %v1504
    %v1540 = vadd.f32 %v1454, %v1506
    %v1541 = vadd.f32 %v1455, %v1508
    %v1542 = vadd.f32 %v1456, %v1510
    %v1543 = vadd.f32 %v1457, %v1512
    %v1544 = vadd.f32 %v1458, %v1514
    %v1545 = vadd.f32 %v1459, %v1516
    %v1546 = vadd.f32 %v1460, %v1518
    %s1547 = sld [smem:[#allocation7 + $0x15]]
    %v1548 = vstv %s1547
    %v1549 = vmul.f32 %v100, %v1548
    %v1550 = vmul.f32 %v101, %v1548
    %v1551 = vmul.f32 %v102, %v1548
    %v1552 = vmul.f32 %v103, %v1548
    %v1553 = vmul.f32 %v104, %v1548
    %v1554 = vmul.f32 %v105, %v1548
    %v1555 = vmul.f32 %v106, %v1548
    %v1556 = vmul.f32 %v107, %v1548
    %v1557 = vmul.f32 %v108, %v1548
    %v1558 = vmul.f32 %v109, %v1548
    %v1559 = vmul.f32 %v110, %v1548
    %v1560 = vmul.f32 %v111, %v1548
    %v1561 = vmul.f32 %v112, %v1548
    %v1562 = vmul.f32 %v113, %v1548
    %v1563 = vadd.f32 %v1533, %v1549
    %v1564 = vadd.f32 %v1534, %v1550
    %v1565 = vadd.f32 %v1535, %v1551
    %v1566 = vadd.f32 %v1536, %v1552
    %v1567 = vadd.f32 %v1537, %v1553
    %v1568 = vadd.f32 %v1538, %v1554
    %v1569 = vadd.f32 %v1539, %v1555
    %v1570 = vadd.f32 %v1540, %v1556
    %v1571 = vadd.f32 %v1541, %v1557
    %v1572 = vadd.f32 %v1542, %v1558
    %v1573 = vadd.f32 %v1543, %v1559
    %v1574 = vadd.f32 %v1544, %v1560
    %v1575 = vadd.f32 %v1545, %v1561
    %v1576 = vadd.f32 %v1546, %v1562
    %s1577 = sld [smem:[#allocation7 + $0x16]]
    %v1578 = vstv %s1577
    %v1579 = vmul.f32 %v100, %v1578
    %v1580 = vmul.f32 %v101, %v1578
    %v1581 = vmul.f32 %v102, %v1578
    %v1582 = vmul.f32 %v103, %v1578
    %v1583 = vmul.f32 %v104, %v1578
    %v1584 = vmul.f32 %v105, %v1578
    %v1585 = vmul.f32 %v106, %v1578
    %v1586 = vmul.f32 %v107, %v1578
    %v1587 = vmul.f32 %v108, %v1578
    %v1588 = vmul.f32 %v109, %v1578
    %v1589 = vmul.f32 %v110, %v1578
    %v1590 = vmul.f32 %v111, %v1578
    %v1591 = vmul.f32 %v112, %v1578
    %v1592 = vmul.f32 %v113, %v1578
    %1607 = vrot.lane.b32.xlu0 %v1579, 127
    %v1608 = vpop.permute.xlu0 %1607
    %1609 = vrot.lane.b32.xlu0 %v1580, 127
    %v1610 = vpop.permute.xlu0 %1609
    %1611 = vrot.lane.b32.xlu0 %v1581, 127
    %v1612 = vpop.permute.xlu0 %1611
    %1613 = vrot.lane.b32.xlu0 %v1582, 127
    %v1614 = vpop.permute.xlu0 %1613
    %1615 = vrot.lane.b32.xlu0 %v1583, 127
    %v1616 = vpop.permute.xlu0 %1615
    %1617 = vrot.lane.b32.xlu0 %v1584, 127
    %v1618 = vpop.permute.xlu0 %1617
    %1619 = vrot.lane.b32.xlu0 %v1585, 127
    %v1620 = vpop.permute.xlu0 %1619
    %1621 = vrot.lane.b32.xlu0 %v1586, 127
    %v1622 = vpop.permute.xlu0 %1621
    %1623 = vrot.lane.b32.xlu0 %v1587, 127
    %v1624 = vpop.permute.xlu0 %1623
    %1625 = vrot.lane.b32.xlu0 %v1588, 127
    %v1626 = vpop.permute.xlu0 %1625
    %1627 = vrot.lane.b32.xlu0 %v1589, 127
    %v1628 = vpop.permute.xlu0 %1627
    %1629 = vrot.lane.b32.xlu0 %v1590, 127
    %v1630 = vpop.permute.xlu0 %1629
    %1631 = vrot.lane.b32.xlu0 %v1591, 127
    %v1632 = vpop.permute.xlu0 %1631
    %1633 = vrot.lane.b32.xlu0 %v1592, 127
    %v1634 = vpop.permute.xlu0 %1633
    %v1649 = vadd.f32 %v1563, %v1608
    %v1650 = vadd.f32 %v1564, %v1610
    %v1651 = vadd.f32 %v1565, %v1612
    %v1652 = vadd.f32 %v1566, %v1614
    %v1653 = vadd.f32 %v1567, %v1616
    %v1654 = vadd.f32 %v1568, %v1618
    %v1655 = vadd.f32 %v1569, %v1620
    %v1656 = vadd.f32 %v1570, %v1622
    %v1657 = vadd.f32 %v1571, %v1624
    %v1658 = vadd.f32 %v1572, %v1626
    %v1659 = vadd.f32 %v1573, %v1628
    %v1660 = vadd.f32 %v1574, %v1630
    %v1661 = vadd.f32 %v1575, %v1632
    %v1662 = vadd.f32 %v1576, %v1634
    %s1663 = sld [smem:[#allocation7 + $0x17]]
    %v1664 = vstv %s1663
    %v1665 = vmul.f32 %v100, %v1664
    %v1666 = vmul.f32 %v101, %v1664
    %v1667 = vmul.f32 %v102, %v1664
    %v1668 = vmul.f32 %v103, %v1664
    %v1669 = vmul.f32 %v104, %v1664
    %v1670 = vmul.f32 %v105, %v1664
    %v1671 = vmul.f32 %v106, %v1664
    %v1672 = vmul.f32 %v107, %v1664
    %v1673 = vmul.f32 %v108, %v1664
    %v1674 = vmul.f32 %v109, %v1664
    %v1675 = vmul.f32 %v110, %v1664
    %v1676 = vmul.f32 %v111, %v1664
    %v1677 = vmul.f32 %v112, %v1664
    %v1678 = vmul.f32 %v113, %v1664
    %1693 = vrot.lane.b32.xlu0 %v1665, 126
    %v1694 = vpop.permute.xlu0 %1693
    %1695 = vrot.lane.b32.xlu0 %v1666, 126
    %v1696 = vpop.permute.xlu0 %1695
    %1697 = vrot.lane.b32.xlu0 %v1667, 126
    %v1698 = vpop.permute.xlu0 %1697
    %1699 = vrot.lane.b32.xlu0 %v1668, 126
    %v1700 = vpop.permute.xlu0 %1699
    %1701 = vrot.lane.b32.xlu0 %v1669, 126
    %v1702 = vpop.permute.xlu0 %1701
    %1703 = vrot.lane.b32.xlu0 %v1670, 126
    %v1704 = vpop.permute.xlu0 %1703
    %1705 = vrot.lane.b32.xlu0 %v1671, 126
    %v1706 = vpop.permute.xlu0 %1705
    %1707 = vrot.lane.b32.xlu0 %v1672, 126
    %v1708 = vpop.permute.xlu0 %1707
    %1709 = vrot.lane.b32.xlu0 %v1673, 126
    %v1710 = vpop.permute.xlu0 %1709
    %1711 = vrot.lane.b32.xlu0 %v1674, 126
    %v1712 = vpop.permute.xlu0 %1711
    %1713 = vrot.lane.b32.xlu0 %v1675, 126
    %v1714 = vpop.permute.xlu0 %1713
    %1715 = vrot.lane.b32.xlu0 %v1676, 126
    %v1716 = vpop.permute.xlu0 %1715
    %1717 = vrot.lane.b32.xlu0 %v1677, 126
    %v1718 = vpop.permute.xlu0 %1717
    %1719 = vrot.lane.b32.xlu0 %v1678, 126
    %v1720 = vpop.permute.xlu0 %1719
    %v1735 = vadd.f32 %v1649, %v1694
    %v1736 = vadd.f32 %v1650, %v1696
    %v1737 = vadd.f32 %v1651, %v1698
    %v1738 = vadd.f32 %v1652, %v1700
    %v1739 = vadd.f32 %v1653, %v1702
    %v1740 = vadd.f32 %v1654, %v1704
    %v1741 = vadd.f32 %v1655, %v1706
    %v1742 = vadd.f32 %v1656, %v1708
    %v1743 = vadd.f32 %v1657, %v1710
    %v1744 = vadd.f32 %v1658, %v1712
    %v1745 = vadd.f32 %v1659, %v1714
    %v1746 = vadd.f32 %v1660, %v1716
    %v1747 = vadd.f32 %v1661, %v1718
    %v1748 = vadd.f32 %v1662, %v1720
    %s1749 = sld [smem:[#allocation7 + $0x18]]
    %v1750 = vstv %s1749
    %v1751 = vmul.f32 %v101, %v1750
    %v1752 = vmul.f32 %v102, %v1750
    %v1753 = vmul.f32 %v103, %v1750
    %v1754 = vmul.f32 %v104, %v1750
    %v1755 = vmul.f32 %v105, %v1750
    %v1756 = vmul.f32 %v106, %v1750
    %v1757 = vmul.f32 %v107, %v1750
    %v1758 = vmul.f32 %v108, %v1750
    %v1759 = vmul.f32 %v109, %v1750
    %v1760 = vmul.f32 %v110, %v1750
    %v1761 = vmul.f32 %v111, %v1750
    %v1762 = vmul.f32 %v112, %v1750
    %v1763 = vmul.f32 %v113, %v1750
    %v1764 = vmul.f32 %v114, %v1750
    %v1765 = vadd.f32 %v1735, %v1751
    %v1766 = vadd.f32 %v1736, %v1752
    %v1767 = vadd.f32 %v1737, %v1753
    %v1768 = vadd.f32 %v1738, %v1754
    %v1769 = vadd.f32 %v1739, %v1755
    %v1770 = vadd.f32 %v1740, %v1756
    %v1771 = vadd.f32 %v1741, %v1757
    %v1772 = vadd.f32 %v1742, %v1758
    %v1773 = vadd.f32 %v1743, %v1759
    %v1774 = vadd.f32 %v1744, %v1760
    %v1775 = vadd.f32 %v1745, %v1761
    %v1776 = vadd.f32 %v1746, %v1762
    %v1777 = vadd.f32 %v1747, %v1763
    %v1778 = vadd.f32 %v1748, %v1764
    %s1779 = sld [smem:[#allocation7 + $0x19]]
    %v1780 = vstv %s1779
    %v1781 = vmul.f32 %v101, %v1780
    %v1782 = vmul.f32 %v102, %v1780
    %v1783 = vmul.f32 %v103, %v1780
    %v1784 = vmul.f32 %v104, %v1780
    %v1785 = vmul.f32 %v105, %v1780
    %v1786 = vmul.f32 %v106, %v1780
    %v1787 = vmul.f32 %v107, %v1780
    %v1788 = vmul.f32 %v108, %v1780
    %v1789 = vmul.f32 %v109, %v1780
    %v1790 = vmul.f32 %v110, %v1780
    %v1791 = vmul.f32 %v111, %v1780
    %v1792 = vmul.f32 %v112, %v1780
    %v1793 = vmul.f32 %v113, %v1780
    %v1794 = vmul.f32 %v114, %v1780
    %1809 = vrot.lane.b32.xlu0 %v1781, 127
    %v1810 = vpop.permute.xlu0 %1809
    %1811 = vrot.lane.b32.xlu0 %v1782, 127
    %v1812 = vpop.permute.xlu0 %1811
    %1813 = vrot.lane.b32.xlu0 %v1783, 127
    %v1814 = vpop.permute.xlu0 %1813
    %1815 = vrot.lane.b32.xlu0 %v1784, 127
    %v1816 = vpop.permute.xlu0 %1815
    %1817 = vrot.lane.b32.xlu0 %v1785, 127
    %v1818 = vpop.permute.xlu0 %1817
    %1819 = vrot.lane.b32.xlu0 %v1786, 127
    %v1820 = vpop.permute.xlu0 %1819
    %1821 = vrot.lane.b32.xlu0 %v1787, 127
    %v1822 = vpop.permute.xlu0 %1821
    %1823 = vrot.lane.b32.xlu0 %v1788, 127
    %v1824 = vpop.permute.xlu0 %1823
    %1825 = vrot.lane.b32.xlu0 %v1789, 127
    %v1826 = vpop.permute.xlu0 %1825
    %1827 = vrot.lane.b32.xlu0 %v1790, 127
    %v1828 = vpop.permute.xlu0 %1827
    %1829 = vrot.lane.b32.xlu0 %v1791, 127
    %v1830 = vpop.permute.xlu0 %1829
    %1831 = vrot.lane.b32.xlu0 %v1792, 127
    %v1832 = vpop.permute.xlu0 %1831
    %1833 = vrot.lane.b32.xlu0 %v1793, 127
    %v1834 = vpop.permute.xlu0 %1833
    %1835 = vrot.lane.b32.xlu0 %v1794, 127
    %v1836 = vpop.permute.xlu0 %1835
    %v1851 = vadd.f32 %v1765, %v1810
    %v1852 = vadd.f32 %v1766, %v1812
    %v1853 = vadd.f32 %v1767, %v1814
    %v1854 = vadd.f32 %v1768, %v1816
    %v1855 = vadd.f32 %v1769, %v1818
    %v1856 = vadd.f32 %v1770, %v1820
    %v1857 = vadd.f32 %v1771, %v1822
    %v1858 = vadd.f32 %v1772, %v1824
    %v1859 = vadd.f32 %v1773, %v1826
    %v1860 = vadd.f32 %v1774, %v1828
    %v1861 = vadd.f32 %v1775, %v1830
    %v1862 = vadd.f32 %v1776, %v1832
    %v1863 = vadd.f32 %v1777, %v1834
    %v1864 = vadd.f32 %v1778, %v1836
    %s1865 = sld [smem:[#allocation7 + $0x1a]]
    %v1866 = vstv %s1865
    %v1867 = vmul.f32 %v101, %v1866
    %v1868 = vmul.f32 %v102, %v1866
    %v1869 = vmul.f32 %v103, %v1866
    %v1870 = vmul.f32 %v104, %v1866
    %v1871 = vmul.f32 %v105, %v1866
    %v1872 = vmul.f32 %v106, %v1866
    %v1873 = vmul.f32 %v107, %v1866
    %v1874 = vmul.f32 %v108, %v1866
    %v1875 = vmul.f32 %v109, %v1866
    %v1876 = vmul.f32 %v110, %v1866
    %v1877 = vmul.f32 %v111, %v1866
    %v1878 = vmul.f32 %v112, %v1866
    %v1879 = vmul.f32 %v113, %v1866
    %v1880 = vmul.f32 %v114, %v1866
    %1895 = vrot.lane.b32.xlu0 %v1867, 126
    %v1896 = vpop.permute.xlu0 %1895
    %1897 = vrot.lane.b32.xlu0 %v1868, 126
    %v1898 = vpop.permute.xlu0 %1897
    %1899 = vrot.lane.b32.xlu0 %v1869, 126
    %v1900 = vpop.permute.xlu0 %1899
    %1901 = vrot.lane.b32.xlu0 %v1870, 126
    %v1902 = vpop.permute.xlu0 %1901
    %1903 = vrot.lane.b32.xlu0 %v1871, 126
    %v1904 = vpop.permute.xlu0 %1903
    %1905 = vrot.lane.b32.xlu0 %v1872, 126
    %v1906 = vpop.permute.xlu0 %1905
    %1907 = vrot.lane.b32.xlu0 %v1873, 126
    %v1908 = vpop.permute.xlu0 %1907
    %1909 = vrot.lane.b32.xlu0 %v1874, 126
    %v1910 = vpop.permute.xlu0 %1909
    %1911 = vrot.lane.b32.xlu0 %v1875, 126
    %v1912 = vpop.permute.xlu0 %1911
    %1913 = vrot.lane.b32.xlu0 %v1876, 126
    %v1914 = vpop.permute.xlu0 %1913
    %1915 = vrot.lane.b32.xlu0 %v1877, 126
    %v1916 = vpop.permute.xlu0 %1915
    %1917 = vrot.lane.b32.xlu0 %v1878, 126
    %v1918 = vpop.permute.xlu0 %1917
    %1919 = vrot.lane.b32.xlu0 %v1879, 126
    %v1920 = vpop.permute.xlu0 %1919
    %1921 = vrot.lane.b32.xlu0 %v1880, 126
    %v1922 = vpop.permute.xlu0 %1921
    %v1937 = vadd.f32 %v1851, %v1896
    %v1938 = vadd.f32 %v1852, %v1898
    %v1939 = vadd.f32 %v1853, %v1900
    %v1940 = vadd.f32 %v1854, %v1902
    %v1941 = vadd.f32 %v1855, %v1904
    %v1942 = vadd.f32 %v1856, %v1906
    %v1943 = vadd.f32 %v1857, %v1908
    %v1944 = vadd.f32 %v1858, %v1910
    %v1945 = vadd.f32 %v1859, %v1912
    %v1946 = vadd.f32 %v1860, %v1914
    %v1947 = vadd.f32 %v1861, %v1916
    %v1948 = vadd.f32 %v1862, %v1918
    %v1949 = vadd.f32 %v1863, %v1920
    %v1950 = vadd.f32 %v1864, %v1922
    %s1951 = sld [smem:[#allocation7 + $0x1b]]
    %v1952 = vstv %s1951
    %v1953 = vmul.f32 %v115, %v1952
    %v1954 = vmul.f32 %v116, %v1952
    %v1955 = vmul.f32 %v117, %v1952
    %v1956 = vmul.f32 %v118, %v1952
    %v1957 = vmul.f32 %v119, %v1952
    %v1958 = vmul.f32 %v120, %v1952
    %v1959 = vmul.f32 %v121, %v1952
    %v1960 = vmul.f32 %v122, %v1952
    %v1961 = vmul.f32 %v123, %v1952
    %v1962 = vmul.f32 %v124, %v1952
    %v1963 = vmul.f32 %v125, %v1952
    %v1964 = vmul.f32 %v126, %v1952
    %v1965 = vmul.f32 %v127, %v1952
    %v1966 = vmul.f32 %v128, %v1952
    %v1967 = vadd.f32 %v1937, %v1953
    %v1968 = vadd.f32 %v1938, %v1954
    %v1969 = vadd.f32 %v1939, %v1955
    %v1970 = vadd.f32 %v1940, %v1956
    %v1971 = vadd.f32 %v1941, %v1957
    %v1972 = vadd.f32 %v1942, %v1958
    %v1973 = vadd.f32 %v1943, %v1959
    %v1974 = vadd.f32 %v1944, %v1960
    %v1975 = vadd.f32 %v1945, %v1961
    %v1976 = vadd.f32 %v1946, %v1962
    %v1977 = vadd.f32 %v1947, %v1963
    %v1978 = vadd.f32 %v1948, %v1964
    %v1979 = vadd.f32 %v1949, %v1965
    %v1980 = vadd.f32 %v1950, %v1966
    %s1981 = sld [smem:[#allocation7 + $0x1c]]
    %v1982 = vstv %s1981
    %v1983 = vmul.f32 %v115, %v1982
    %v1984 = vmul.f32 %v116, %v1982
    %v1985 = vmul.f32 %v117, %v1982
    %v1986 = vmul.f32 %v118, %v1982
    %v1987 = vmul.f32 %v119, %v1982
    %v1988 = vmul.f32 %v120, %v1982
    %v1989 = vmul.f32 %v121, %v1982
    %v1990 = vmul.f32 %v122, %v1982
    %v1991 = vmul.f32 %v123, %v1982
    %v1992 = vmul.f32 %v124, %v1982
    %v1993 = vmul.f32 %v125, %v1982
    %v1994 = vmul.f32 %v126, %v1982
    %v1995 = vmul.f32 %v127, %v1982
    %v1996 = vmul.f32 %v128, %v1982
    %2011 = vrot.lane.b32.xlu0 %v1983, 127
    %v2012 = vpop.permute.xlu0 %2011
    %2013 = vrot.lane.b32.xlu0 %v1984, 127
    %v2014 = vpop.permute.xlu0 %2013
    %2015 = vrot.lane.b32.xlu0 %v1985, 127
    %v2016 = vpop.permute.xlu0 %2015
    %2017 = vrot.lane.b32.xlu0 %v1986, 127
    %v2018 = vpop.permute.xlu0 %2017
    %2019 = vrot.lane.b32.xlu0 %v1987, 127
    %v2020 = vpop.permute.xlu0 %2019
    %2021 = vrot.lane.b32.xlu0 %v1988, 127
    %v2022 = vpop.permute.xlu0 %2021
    %2023 = vrot.lane.b32.xlu0 %v1989, 127
    %v2024 = vpop.permute.xlu0 %2023
    %2025 = vrot.lane.b32.xlu0 %v1990, 127
    %v2026 = vpop.permute.xlu0 %2025
    %2027 = vrot.lane.b32.xlu0 %v1991, 127
    %v2028 = vpop.permute.xlu0 %2027
    %2029 = vrot.lane.b32.xlu0 %v1992, 127
    %v2030 = vpop.permute.xlu0 %2029
    %2031 = vrot.lane.b32.xlu0 %v1993, 127
    %v2032 = vpop.permute.xlu0 %2031
    %2033 = vrot.lane.b32.xlu0 %v1994, 127
    %v2034 = vpop.permute.xlu0 %2033
    %2035 = vrot.lane.b32.xlu0 %v1995, 127
    %v2036 = vpop.permute.xlu0 %2035
    %2037 = vrot.lane.b32.xlu0 %v1996, 127
    %v2038 = vpop.permute.xlu0 %2037
    %v2053 = vadd.f32 %v1967, %v2012
    %v2054 = vadd.f32 %v1968, %v2014
    %v2055 = vadd.f32 %v1969, %v2016
    %v2056 = vadd.f32 %v1970, %v2018
    %v2057 = vadd.f32 %v1971, %v2020
    %v2058 = vadd.f32 %v1972, %v2022
    %v2059 = vadd.f32 %v1973, %v2024
    %v2060 = vadd.f32 %v1974, %v2026
    %v2061 = vadd.f32 %v1975, %v2028
    %v2062 = vadd.f32 %v1976, %v2030
    %v2063 = vadd.f32 %v1977, %v2032
    %v2064 = vadd.f32 %v1978, %v2034
    %v2065 = vadd.f32 %v1979, %v2036
    %v2066 = vadd.f32 %v1980, %v2038
    %s2067 = sld [smem:[#allocation7 + $0x1d]]
    %v2068 = vstv %s2067
    %v2069 = vmul.f32 %v115, %v2068
    %v2070 = vmul.f32 %v116, %v2068
    %v2071 = vmul.f32 %v117, %v2068
    %v2072 = vmul.f32 %v118, %v2068
    %v2073 = vmul.f32 %v119, %v2068
    %v2074 = vmul.f32 %v120, %v2068
    %v2075 = vmul.f32 %v121, %v2068
    %v2076 = vmul.f32 %v122, %v2068
    %v2077 = vmul.f32 %v123, %v2068
    %v2078 = vmul.f32 %v124, %v2068
    %v2079 = vmul.f32 %v125, %v2068
    %v2080 = vmul.f32 %v126, %v2068
    %v2081 = vmul.f32 %v127, %v2068
    %v2082 = vmul.f32 %v128, %v2068
    %2097 = vrot.lane.b32.xlu0 %v2069, 126
    %v2098 = vpop.permute.xlu0 %2097
    %2099 = vrot.lane.b32.xlu0 %v2070, 126
    %v2100 = vpop.permute.xlu0 %2099
    %2101 = vrot.lane.b32.xlu0 %v2071, 126
    %v2102 = vpop.permute.xlu0 %2101
    %2103 = vrot.lane.b32.xlu0 %v2072, 126
    %v2104 = vpop.permute.xlu0 %2103
    %2105 = vrot.lane.b32.xlu0 %v2073, 126
    %v2106 = vpop.permute.xlu0 %2105
    %2107 = vrot.lane.b32.xlu0 %v2074, 126
    %v2108 = vpop.permute.xlu0 %2107
    %2109 = vrot.lane.b32.xlu0 %v2075, 126
    %v2110 = vpop.permute.xlu0 %2109
    %2111 = vrot.lane.b32.xlu0 %v2076, 126
    %v2112 = vpop.permute.xlu0 %2111
    %2113 = vrot.lane.b32.xlu0 %v2077, 126
    %v2114 = vpop.permute.xlu0 %2113
    %2115 = vrot.lane.b32.xlu0 %v2078, 126
    %v2116 = vpop.permute.xlu0 %2115
    %2117 = vrot.lane.b32.xlu0 %v2079, 126
    %v2118 = vpop.permute.xlu0 %2117
    %2119 = vrot.lane.b32.xlu0 %v2080, 126
    %v2120 = vpop.permute.xlu0 %2119
    %2121 = vrot.lane.b32.xlu0 %v2081, 126
    %v2122 = vpop.permute.xlu0 %2121
    %2123 = vrot.lane.b32.xlu0 %v2082, 126
    %v2124 = vpop.permute.xlu0 %2123
    %v2139 = vadd.f32 %v2053, %v2098
    %v2140 = vadd.f32 %v2054, %v2100
    %v2141 = vadd.f32 %v2055, %v2102
    %v2142 = vadd.f32 %v2056, %v2104
    %v2143 = vadd.f32 %v2057, %v2106
    %v2144 = vadd.f32 %v2058, %v2108
    %v2145 = vadd.f32 %v2059, %v2110
    %v2146 = vadd.f32 %v2060, %v2112
    %v2147 = vadd.f32 %v2061, %v2114
    %v2148 = vadd.f32 %v2062, %v2116
    %v2149 = vadd.f32 %v2063, %v2118
    %v2150 = vadd.f32 %v2064, %v2120
    %v2151 = vadd.f32 %v2065, %v2122
    %v2152 = vadd.f32 %v2066, %v2124
    %s2153 = sld [smem:[#allocation7 + $0x1e]]
    %v2154 = vstv %s2153
    %v2155 = vmul.f32 %v116, %v2154
    %v2156 = vmul.f32 %v117, %v2154
    %v2157 = vmul.f32 %v118, %v2154
    %v2158 = vmul.f32 %v119, %v2154
    %v2159 = vmul.f32 %v120, %v2154
    %v2160 = vmul.f32 %v121, %v2154
    %v2161 = vmul.f32 %v122, %v2154
    %v2162 = vmul.f32 %v123, %v2154
    %v2163 = vmul.f32 %v124, %v2154
    %v2164 = vmul.f32 %v125, %v2154
    %v2165 = vmul.f32 %v126, %v2154
    %v2166 = vmul.f32 %v127, %v2154
    %v2167 = vmul.f32 %v128, %v2154
    %v2168 = vmul.f32 %v129, %v2154
    %v2169 = vadd.f32 %v2139, %v2155
    %v2170 = vadd.f32 %v2140, %v2156
    %v2171 = vadd.f32 %v2141, %v2157
    %v2172 = vadd.f32 %v2142, %v2158
    %v2173 = vadd.f32 %v2143, %v2159
    %v2174 = vadd.f32 %v2144, %v2160
    %v2175 = vadd.f32 %v2145, %v2161
    %v2176 = vadd.f32 %v2146, %v2162
    %v2177 = vadd.f32 %v2147, %v2163
    %v2178 = vadd.f32 %v2148, %v2164
    %v2179 = vadd.f32 %v2149, %v2165
    %v2180 = vadd.f32 %v2150, %v2166
    %v2181 = vadd.f32 %v2151, %v2167
    %v2182 = vadd.f32 %v2152, %v2168
    %s2183 = sld [smem:[#allocation7 + $0x1f]]
    %v2184 = vstv %s2183
    %v2185 = vmul.f32 %v116, %v2184
    %v2186 = vmul.f32 %v117, %v2184
    %v2187 = vmul.f32 %v118, %v2184
    %v2188 = vmul.f32 %v119, %v2184
    %v2189 = vmul.f32 %v120, %v2184
    %v2190 = vmul.f32 %v121, %v2184
    %v2191 = vmul.f32 %v122, %v2184
    %v2192 = vmul.f32 %v123, %v2184
    %v2193 = vmul.f32 %v124, %v2184
    %v2194 = vmul.f32 %v125, %v2184
    %v2195 = vmul.f32 %v126, %v2184
    %v2196 = vmul.f32 %v127, %v2184
    %v2197 = vmul.f32 %v128, %v2184
    %v2198 = vmul.f32 %v129, %v2184
    %2213 = vrot.lane.b32.xlu0 %v2185, 127
    %v2214 = vpop.permute.xlu0 %2213
    %2215 = vrot.lane.b32.xlu0 %v2186, 127
    %v2216 = vpop.permute.xlu0 %2215
    %2217 = vrot.lane.b32.xlu0 %v2187, 127
    %v2218 = vpop.permute.xlu0 %2217
    %2219 = vrot.lane.b32.xlu0 %v2188, 127
    %v2220 = vpop.permute.xlu0 %2219
    %2221 = vrot.lane.b32.xlu0 %v2189, 127
    %v2222 = vpop.permute.xlu0 %2221
    %2223 = vrot.lane.b32.xlu0 %v2190, 127
    %v2224 = vpop.permute.xlu0 %2223
    %2225 = vrot.lane.b32.xlu0 %v2191, 127
    %v2226 = vpop.permute.xlu0 %2225
    %2227 = vrot.lane.b32.xlu0 %v2192, 127
    %v2228 = vpop.permute.xlu0 %2227
    %2229 = vrot.lane.b32.xlu0 %v2193, 127
    %v2230 = vpop.permute.xlu0 %2229
    %2231 = vrot.lane.b32.xlu0 %v2194, 127
    %v2232 = vpop.permute.xlu0 %2231
    %2233 = vrot.lane.b32.xlu0 %v2195, 127
    %v2234 = vpop.permute.xlu0 %2233
    %2235 = vrot.lane.b32.xlu0 %v2196, 127
    %v2236 = vpop.permute.xlu0 %2235
    %2237 = vrot.lane.b32.xlu0 %v2197, 127
    %v2238 = vpop.permute.xlu0 %2237
    %2239 = vrot.lane.b32.xlu0 %v2198, 127
    %v2240 = vpop.permute.xlu0 %2239
    %v2255 = vadd.f32 %v2169, %v2214
    %v2256 = vadd.f32 %v2170, %v2216
    %v2257 = vadd.f32 %v2171, %v2218
    %v2258 = vadd.f32 %v2172, %v2220
    %v2259 = vadd.f32 %v2173, %v2222
    %v2260 = vadd.f32 %v2174, %v2224
    %v2261 = vadd.f32 %v2175, %v2226
    %v2262 = vadd.f32 %v2176, %v2228
    %v2263 = vadd.f32 %v2177, %v2230
    %v2264 = vadd.f32 %v2178, %v2232
    %v2265 = vadd.f32 %v2179, %v2234
    %v2266 = vadd.f32 %v2180, %v2236
    %v2267 = vadd.f32 %v2181, %v2238
    %v2268 = vadd.f32 %v2182, %v2240
    %s2269 = sld [smem:[#allocation7 + $0x20]]
    %v2270 = vstv %s2269
    %v2271 = vmul.f32 %v116, %v2270
    %v2272 = vmul.f32 %v117, %v2270
    %v2273 = vmul.f32 %v118, %v2270
    %v2274 = vmul.f32 %v119, %v2270
    %v2275 = vmul.f32 %v120, %v2270
    %v2276 = vmul.f32 %v121, %v2270
    %v2277 = vmul.f32 %v122, %v2270
    %v2278 = vmul.f32 %v123, %v2270
    %v2279 = vmul.f32 %v124, %v2270
    %v2280 = vmul.f32 %v125, %v2270
    %v2281 = vmul.f32 %v126, %v2270
    %v2282 = vmul.f32 %v127, %v2270
    %v2283 = vmul.f32 %v128, %v2270
    %v2284 = vmul.f32 %v129, %v2270
    %2299 = vrot.lane.b32.xlu0 %v2271, 126
    %v2300 = vpop.permute.xlu0 %2299
    %2301 = vrot.lane.b32.xlu0 %v2272, 126
    %v2302 = vpop.permute.xlu0 %2301
    %2303 = vrot.lane.b32.xlu0 %v2273, 126
    %v2304 = vpop.permute.xlu0 %2303
    %2305 = vrot.lane.b32.xlu0 %v2274, 126
    %v2306 = vpop.permute.xlu0 %2305
    %2307 = vrot.lane.b32.xlu0 %v2275, 126
    %v2308 = vpop.permute.xlu0 %2307
    %2309 = vrot.lane.b32.xlu0 %v2276, 126
    %v2310 = vpop.permute.xlu0 %2309
    %2311 = vrot.lane.b32.xlu0 %v2277, 126
    %v2312 = vpop.permute.xlu0 %2311
    %2313 = vrot.lane.b32.xlu0 %v2278, 126
    %v2314 = vpop.permute.xlu0 %2313
    %2315 = vrot.lane.b32.xlu0 %v2279, 126
    %v2316 = vpop.permute.xlu0 %2315
    %2317 = vrot.lane.b32.xlu0 %v2280, 126
    %v2318 = vpop.permute.xlu0 %2317
    %2319 = vrot.lane.b32.xlu0 %v2281, 126
    %v2320 = vpop.permute.xlu0 %2319
    %2321 = vrot.lane.b32.xlu0 %v2282, 126
    %v2322 = vpop.permute.xlu0 %2321
    %2323 = vrot.lane.b32.xlu0 %v2283, 126
    %v2324 = vpop.permute.xlu0 %2323
    %2325 = vrot.lane.b32.xlu0 %v2284, 126
    %v2326 = vpop.permute.xlu0 %2325
    %v2341 = vadd.f32 %v2255, %v2300
    %v2342 = vadd.f32 %v2256, %v2302
    %v2343 = vadd.f32 %v2257, %v2304
    %v2344 = vadd.f32 %v2258, %v2306
    %v2345 = vadd.f32 %v2259, %v2308
    %v2346 = vadd.f32 %v2260, %v2310
    %v2347 = vadd.f32 %v2261, %v2312
    %v2348 = vadd.f32 %v2262, %v2314
    %v2349 = vadd.f32 %v2263, %v2316
    %v2350 = vadd.f32 %v2264, %v2318
    %v2351 = vadd.f32 %v2265, %v2320
    %v2352 = vadd.f32 %v2266, %v2322
    %v2353 = vadd.f32 %v2267, %v2324
    %v2354 = vadd.f32 %v2268, %v2326
    %s2355 = sld [smem:[#allocation7 + $0x21]]
    %v2356 = vstv %s2355
    %v2357 = vmul.f32 %v117, %v2356
    %v2358 = vmul.f32 %v118, %v2356
    %v2359 = vmul.f32 %v119, %v2356
    %v2360 = vmul.f32 %v120, %v2356
    %v2361 = vmul.f32 %v121, %v2356
    %v2362 = vmul.f32 %v122, %v2356
    %v2363 = vmul.f32 %v123, %v2356
    %v2364 = vmul.f32 %v124, %v2356
    %v2365 = vmul.f32 %v125, %v2356
    %v2366 = vmul.f32 %v126, %v2356
    %v2367 = vmul.f32 %v127, %v2356
    %v2368 = vmul.f32 %v128, %v2356
    %v2369 = vmul.f32 %v129, %v2356
    %v2370 = vmul.f32 %v130, %v2356
    %v2371 = vadd.f32 %v2341, %v2357
    %v2372 = vadd.f32 %v2342, %v2358
    %v2373 = vadd.f32 %v2343, %v2359
    %v2374 = vadd.f32 %v2344, %v2360
    %v2375 = vadd.f32 %v2345, %v2361
    %v2376 = vadd.f32 %v2346, %v2362
    %v2377 = vadd.f32 %v2347, %v2363
    %v2378 = vadd.f32 %v2348, %v2364
    %v2379 = vadd.f32 %v2349, %v2365
    %v2380 = vadd.f32 %v2350, %v2366
    %v2381 = vadd.f32 %v2351, %v2367
    %v2382 = vadd.f32 %v2352, %v2368
    %v2383 = vadd.f32 %v2353, %v2369
    %v2384 = vadd.f32 %v2354, %v2370
    %s2385 = sld [smem:[#allocation7 + $0x22]]
    %v2386 = vstv %s2385
    %v2387 = vmul.f32 %v117, %v2386
    %v2388 = vmul.f32 %v118, %v2386
    %v2389 = vmul.f32 %v119, %v2386
    %v2390 = vmul.f32 %v120, %v2386
    %v2391 = vmul.f32 %v121, %v2386
    %v2392 = vmul.f32 %v122, %v2386
    %v2393 = vmul.f32 %v123, %v2386
    %v2394 = vmul.f32 %v124, %v2386
    %v2395 = vmul.f32 %v125, %v2386
    %v2396 = vmul.f32 %v126, %v2386
    %v2397 = vmul.f32 %v127, %v2386
    %v2398 = vmul.f32 %v128, %v2386
    %v2399 = vmul.f32 %v129, %v2386
    %v2400 = vmul.f32 %v130, %v2386
    %2415 = vrot.lane.b32.xlu0 %v2387, 127
    %v2416 = vpop.permute.xlu0 %2415
    %2417 = vrot.lane.b32.xlu0 %v2388, 127
    %v2418 = vpop.permute.xlu0 %2417
    %2419 = vrot.lane.b32.xlu0 %v2389, 127
    %v2420 = vpop.permute.xlu0 %2419
    %2421 = vrot.lane.b32.xlu0 %v2390, 127
    %v2422 = vpop.permute.xlu0 %2421
    %2423 = vrot.lane.b32.xlu0 %v2391, 127
    %v2424 = vpop.permute.xlu0 %2423
    %2425 = vrot.lane.b32.xlu0 %v2392, 127
    %v2426 = vpop.permute.xlu0 %2425
    %2427 = vrot.lane.b32.xlu0 %v2393, 127
    %v2428 = vpop.permute.xlu0 %2427
    %2429 = vrot.lane.b32.xlu0 %v2394, 127
    %v2430 = vpop.permute.xlu0 %2429
    %2431 = vrot.lane.b32.xlu0 %v2395, 127
    %v2432 = vpop.permute.xlu0 %2431
    %2433 = vrot.lane.b32.xlu0 %v2396, 127
    %v2434 = vpop.permute.xlu0 %2433
    %2435 = vrot.lane.b32.xlu0 %v2397, 127
    %v2436 = vpop.permute.xlu0 %2435
    %2437 = vrot.lane.b32.xlu0 %v2398, 127
    %v2438 = vpop.permute.xlu0 %2437
    %2439 = vrot.lane.b32.xlu0 %v2399, 127
    %v2440 = vpop.permute.xlu0 %2439
    %2441 = vrot.lane.b32.xlu0 %v2400, 127
    %v2442 = vpop.permute.xlu0 %2441
    %v2457 = vadd.f32 %v2371, %v2416
    %v2458 = vadd.f32 %v2372, %v2418
    %v2459 = vadd.f32 %v2373, %v2420
    %v2460 = vadd.f32 %v2374, %v2422
    %v2461 = vadd.f32 %v2375, %v2424
    %v2462 = vadd.f32 %v2376, %v2426
    %v2463 = vadd.f32 %v2377, %v2428
    %v2464 = vadd.f32 %v2378, %v2430
    %v2465 = vadd.f32 %v2379, %v2432
    %v2466 = vadd.f32 %v2380, %v2434
    %v2467 = vadd.f32 %v2381, %v2436
    %v2468 = vadd.f32 %v2382, %v2438
    %v2469 = vadd.f32 %v2383, %v2440
    %v2470 = vadd.f32 %v2384, %v2442
    %s2471 = sld [smem:[#allocation7 + $0x23]]
    %v2472 = vstv %s2471
    %v2473 = vmul.f32 %v117, %v2472
    %v2474 = vmul.f32 %v118, %v2472
    %v2475 = vmul.f32 %v119, %v2472
    %v2476 = vmul.f32 %v120, %v2472
    %v2477 = vmul.f32 %v121, %v2472
    %v2478 = vmul.f32 %v122, %v2472
    %v2479 = vmul.f32 %v123, %v2472
    %v2480 = vmul.f32 %v124, %v2472
    %v2481 = vmul.f32 %v125, %v2472
    %v2482 = vmul.f32 %v126, %v2472
    %v2483 = vmul.f32 %v127, %v2472
    %v2484 = vmul.f32 %v128, %v2472
    %v2485 = vmul.f32 %v129, %v2472
    %v2486 = vmul.f32 %v130, %v2472
    %2501 = vrot.lane.b32.xlu0 %v2473, 126
    %v2502 = vpop.permute.xlu0 %2501
    %2503 = vrot.lane.b32.xlu0 %v2474, 126
    %v2504 = vpop.permute.xlu0 %2503
    %2505 = vrot.lane.b32.xlu0 %v2475, 126
    %v2506 = vpop.permute.xlu0 %2505
    %2507 = vrot.lane.b32.xlu0 %v2476, 126
    %v2508 = vpop.permute.xlu0 %2507
    %2509 = vrot.lane.b32.xlu0 %v2477, 126
    %v2510 = vpop.permute.xlu0 %2509
    %2511 = vrot.lane.b32.xlu0 %v2478, 126
    %v2512 = vpop.permute.xlu0 %2511
    %2513 = vrot.lane.b32.xlu0 %v2479, 126
    %v2514 = vpop.permute.xlu0 %2513
    %2515 = vrot.lane.b32.xlu0 %v2480, 126
    %v2516 = vpop.permute.xlu0 %2515
    %2517 = vrot.lane.b32.xlu0 %v2481, 126
    %v2518 = vpop.permute.xlu0 %2517
    %2519 = vrot.lane.b32.xlu0 %v2482, 126
    %v2520 = vpop.permute.xlu0 %2519
    %2521 = vrot.lane.b32.xlu0 %v2483, 126
    %v2522 = vpop.permute.xlu0 %2521
    %2523 = vrot.lane.b32.xlu0 %v2484, 126
    %v2524 = vpop.permute.xlu0 %2523
    %2525 = vrot.lane.b32.xlu0 %v2485, 126
    %v2526 = vpop.permute.xlu0 %2525
    %2527 = vrot.lane.b32.xlu0 %v2486, 126
    %v2528 = vpop.permute.xlu0 %2527
    %v2543 = vadd.f32 %v2457, %v2502
    %v2544 = vadd.f32 %v2458, %v2504
    %v2545 = vadd.f32 %v2459, %v2506
    %v2546 = vadd.f32 %v2460, %v2508
    %v2547 = vadd.f32 %v2461, %v2510
    %v2548 = vadd.f32 %v2462, %v2512
    %v2549 = vadd.f32 %v2463, %v2514
    %v2550 = vadd.f32 %v2464, %v2516
    %v2551 = vadd.f32 %v2465, %v2518
    %v2552 = vadd.f32 %v2466, %v2520
    %v2553 = vadd.f32 %v2467, %v2522
    %v2554 = vadd.f32 %v2468, %v2524
    %v2555 = vadd.f32 %v2469, %v2526
    %v2556 = vadd.f32 %v2470, %v2528
    %v2557 = vmax.f32 %v2543, 0.0
    %v2558 = vmax.f32 %v2544, 0.0
    %v2559 = vmax.f32 %v2545, 0.0
    %v2560 = vmax.f32 %v2546, 0.0
    %v2561 = vmax.f32 %v2547, 0.0
    %v2562 = vmax.f32 %v2548, 0.0
    %v2563 = vmax.f32 %v2549, 0.0
    %v2564 = vmax.f32 %v2550, 0.0
    %v2565 = vmax.f32 %v2551, 0.0
    %v2566 = vmax.f32 %v2552, 0.0
    %v2567 = vmax.f32 %v2553, 0.0
    %v2568 = vmax.f32 %v2554, 0.0
    %v2569 = vmax.f32 %v2555, 0.0
    %v2570 = vmax.f32 %v2556, 0.0
    %v2571 = vld [vmem:[#allocation8] sm:$0xff]
    %v2572 = vld [vmem:[#allocation8 + $0x8] sm:$0x3f]
    %v2573 = vld [vmem:[#allocation8 + $0x10] sm:$0xff]
    %v2574 = vld [vmem:[#allocation8 + $0x18] sm:$0x3f]
    %v2575 = vld [vmem:[#allocation8 + $0x20] sm:$0xff]
    %v2576 = vld [vmem:[#allocation8 + $0x28] sm:$0x3f]
    %v2577 = vld [vmem:[#allocation8 + $0x30] sm:$0xff]
    %v2578 = vld [vmem:[#allocation8 + $0x38] sm:$0x3f]
    %v2579 = vld [vmem:[#allocation8 + $0x40] sm:$0xff]
    %v2580 = vld [vmem:[#allocation8 + $0x48] sm:$0x3f]
    %v2581 = vld [vmem:[#allocation8 + $0x50] sm:$0xff]
    %v2582 = vld [vmem:[#allocation8 + $0x58] sm:$0x3f]
    %v2583 = vld [vmem:[#allocation8 + $0x60] sm:$0xff]
    %v2584 = vld [vmem:[#allocation8 + $0x68] sm:$0x3f]
    %v2585 = vld [vmem:[#allocation8 + $0x70] sm:$0xff]
    %v2586 = vld [vmem:[#allocation8 + $0x78] sm:$0x3f]
    %v2587 = vld [vmem:[#allocation8 + $0x80] sm:$0xff]
    %v2588 = vld [vmem:[#allocation8 + $0x88] sm:$0x3f]
    %v2589 = vld [vmem:[#allocation8 + $0x90] sm:$0xff]
    %v2590 = vld [vmem:[#allocation8 + $0x98] sm:$0x3f]
    %v2591 = vld [vmem:[#allocation8 + $0xa0] sm:$0xff]
    %v2592 = vld [vmem:[#allocation8 + $0xa8] sm:$0x3f]
    %v2593 = vld [vmem:[#allocation8 + $0xb0] sm:$0xff]
    %v2594 = vld [vmem:[#allocation8 + $0xb8] sm:$0x3f]
    %v2595 = vld [vmem:[#allocation8 + $0xc0] sm:$0xff]
    %v2596 = vld [vmem:[#allocation8 + $0xc8] sm:$0x3f]
    %v2597 = vld [vmem:[#allocation8 + $0xd0] sm:$0xff]
    %v2598 = vld [vmem:[#allocation8 + $0xd8] sm:$0x3f]
    %vm2599 = vcmask 113664
    %v2601 = vsel %vm2599, %v2557, 0
    %vm2603 = vcmask 1045504
    %v2605 = vsel %vm2603, %v2572, 0
    %2607 = vmatpush.msra.mxu0 0.0
    %2608 = vmatpush.msra.mxu0 0.0
    %2609 = vmatpush.msra.mxu0 0.0
    %2610 = vmatpush.msra.mxu0 0.0
    %2611 = vmatpush.msra.mxu0 0.0
    %2612 = vmatpush.msra.mxu0 0.0
    %2613 = vmatpush.msra.mxu0 0.0
    %2614 = vmatpush.msra.mxu0 0.0
    %2615 = vmatpush.msra.mxu0 0.0
    %2616 = vmatpush.msra.mxu0 0.0
    %2617 = vmatpush.msra.mxu0 0.0
    %2618 = vmatpush.msra.mxu0 0.0
    %2619 = vmatpush.msra.mxu0 0.0
    %2620 = vmatpush.msra.mxu0 0.0
    %2621 = vmatpush.msra.mxu0 %v2605
    %2622 = vmatpush.msra.mxu0 %v2571
    %2623 = vmatmul.f32.gmra.mxu0 %v2601
    %v2624 = vpop.f32.mrf.mxu0
    %v2625 = vadd.f32 0.0, %v2624
    %2626 = vdwg.mxu0
    %v2628 = vsel %vm2599, %v2558, 0
    %v2631 = vsel %vm2603, %v2574, 0
    %2633 = vmatpush.msra.mxu0 0.0
    %2634 = vmatpush.msra.mxu0 0.0
    %2635 = vmatpush.msra.mxu0 0.0
    %2636 = vmatpush.msra.mxu0 0.0
    %2637 = vmatpush.msra.mxu0 0.0
    %2638 = vmatpush.msra.mxu0 0.0
    %2639 = vmatpush.msra.mxu0 0.0
    %2640 = vmatpush.msra.mxu0 0.0
    %2641 = vmatpush.msra.mxu0 0.0
    %2642 = vmatpush.msra.mxu0 0.0
    %2643 = vmatpush.msra.mxu0 0.0
    %2644 = vmatpush.msra.mxu0 0.0
    %2645 = vmatpush.msra.mxu0 0.0
    %2646 = vmatpush.msra.mxu0 0.0
    %2647 = vmatpush.msra.mxu0 %v2631
    %2648 = vmatpush.msra.mxu0 %v2573
    %2649 = vmatmul.f32.gmra.mxu0 %v2628
    %v2650 = vpop.f32.mrf.mxu0
    %v2651 = vadd.f32 0.0, %v2650
    %2652 = vdwg.mxu0
    %v2654 = vsel %vm2599, %v2559, 0
    %v2657 = vsel %vm2603, %v2576, 0
    %2659 = vmatpush.msra.mxu0 0.0
    %2660 = vmatpush.msra.mxu0 0.0
    %2661 = vmatpush.msra.mxu0 0.0
    %2662 = vmatpush.msra.mxu0 0.0
    %2663 = vmatpush.msra.mxu0 0.0
    %2664 = vmatpush.msra.mxu0 0.0
    %2665 = vmatpush.msra.mxu0 0.0
    %2666 = vmatpush.msra.mxu0 0.0
    %2667 = vmatpush.msra.mxu0 0.0
    %2668 = vmatpush.msra.mxu0 0.0
    %2669 = vmatpush.msra.mxu0 0.0
    %2670 = vmatpush.msra.mxu0 0.0
    %2671 = vmatpush.msra.mxu0 0.0
    %2672 = vmatpush.msra.mxu0 0.0
    %2673 = vmatpush.msra.mxu0 %v2657
    %2674 = vmatpush.msra.mxu0 %v2575
    %2675 = vmatmul.f32.gmra.mxu0 %v2654
    %v2676 = vpop.f32.mrf.mxu0
    %v2677 = vadd.f32 0.0, %v2676
    %2678 = vdwg.mxu0
    %v2680 = vsel %vm2599, %v2560, 0
    %v2683 = vsel %vm2603, %v2578, 0
    %2685 = vmatpush.msra.mxu0 0.0
    %2686 = vmatpush.msra.mxu0 0.0
    %2687 = vmatpush.msra.mxu0 0.0
    %2688 = vmatpush.msra.mxu0 0.0
    %2689 = vmatpush.msra.mxu0 0.0
    %2690 = vmatpush.msra.mxu0 0.0
    %2691 = vmatpush.msra.mxu0 0.0
    %2692 = vmatpush.msra.mxu0 0.0
    %2693 = vmatpush.msra.mxu0 0.0
    %2694 = vmatpush.msra.mxu0 0.0
    %2695 = vmatpush.msra.mxu0 0.0
    %2696 = vmatpush.msra.mxu0 0.0
    %2697 = vmatpush.msra.mxu0 0.0
    %2698 = vmatpush.msra.mxu0 0.0
    %2699 = vmatpush.msra.mxu0 %v2683
    %2700 = vmatpush.msra.mxu0 %v2577
    %2701 = vmatmul.f32.gmra.mxu0 %v2680
    %v2702 = vpop.f32.mrf.mxu0
    %v2703 = vadd.f32 0.0, %v2702
    %2704 = vdwg.mxu0
    %v2706 = vsel %vm2599, %v2561, 0
    %v2709 = vsel %vm2603, %v2580, 0
    %2711 = vmatpush.msra.mxu0 0.0
    %2712 = vmatpush.msra.mxu0 0.0
    %2713 = vmatpush.msra.mxu0 0.0
    %2714 = vmatpush.msra.mxu0 0.0
    %2715 = vmatpush.msra.mxu0 0.0
    %2716 = vmatpush.msra.mxu0 0.0
    %2717 = vmatpush.msra.mxu0 0.0
    %2718 = vmatpush.msra.mxu0 0.0
    %2719 = vmatpush.msra.mxu0 0.0
    %2720 = vmatpush.msra.mxu0 0.0
    %2721 = vmatpush.msra.mxu0 0.0
    %2722 = vmatpush.msra.mxu0 0.0
    %2723 = vmatpush.msra.mxu0 0.0
    %2724 = vmatpush.msra.mxu0 0.0
    %2725 = vmatpush.msra.mxu0 %v2709
    %2726 = vmatpush.msra.mxu0 %v2579
    %2727 = vmatmul.f32.gmra.mxu0 %v2706
    %v2728 = vpop.f32.mrf.mxu0
    %v2729 = vadd.f32 0.0, %v2728
    %2730 = vdwg.mxu0
    %v2732 = vsel %vm2599, %v2562, 0
    %v2735 = vsel %vm2603, %v2582, 0
    %2737 = vmatpush.msra.mxu0 0.0
    %2738 = vmatpush.msra.mxu0 0.0
    %2739 = vmatpush.msra.mxu0 0.0
    %2740 = vmatpush.msra.mxu0 0.0
    %2741 = vmatpush.msra.mxu0 0.0
    %2742 = vmatpush.msra.mxu0 0.0
    %2743 = vmatpush.msra.mxu0 0.0
    %2744 = vmatpush.msra.mxu0 0.0
    %2745 = vmatpush.msra.mxu0 0.0
    %2746 = vmatpush.msra.mxu0 0.0
    %2747 = vmatpush.msra.mxu0 0.0
    %2748 = vmatpush.msra.mxu0 0.0
    %2749 = vmatpush.msra.mxu0 0.0
    %2750 = vmatpush.msra.mxu0 0.0
    %2751 = vmatpush.msra.mxu0 %v2735
    %2752 = vmatpush.msra.mxu0 %v2581
    %2753 = vmatmul.f32.gmra.mxu0 %v2732
    %v2754 = vpop.f32.mrf.mxu0
    %v2755 = vadd.f32 0.0, %v2754
    %2756 = vdwg.mxu0
    %v2758 = vsel %vm2599, %v2563, 0
    %v2761 = vsel %vm2603, %v2584, 0
    %2763 = vmatpush.msra.mxu0 0.0
    %2764 = vmatpush.msra.mxu0 0.0
    %2765 = vmatpush.msra.mxu0 0.0
    %2766 = vmatpush.msra.mxu0 0.0
    %2767 = vmatpush.msra.mxu0 0.0
    %2768 = vmatpush.msra.mxu0 0.0
    %2769 = vmatpush.msra.mxu0 0.0
    %2770 = vmatpush.msra.mxu0 0.0
    %2771 = vmatpush.msra.mxu0 0.0
    %2772 = vmatpush.msra.mxu0 0.0
    %2773 = vmatpush.msra.mxu0 0.0
    %2774 = vmatpush.msra.mxu0 0.0
    %2775 = vmatpush.msra.mxu0 0.0
    %2776 = vmatpush.msra.mxu0 0.0
    %2777 = vmatpush.msra.mxu0 %v2761
    %2778 = vmatpush.msra.mxu0 %v2583
    %2779 = vmatmul.f32.gmra.mxu0 %v2758
    %v2780 = vpop.f32.mrf.mxu0
    %v2781 = vadd.f32 0.0, %v2780
    %2782 = vdwg.mxu0
    %v2784 = vsel %vm2599, %v2564, 0
    %v2787 = vsel %vm2603, %v2586, 0
    %2789 = vmatpush.msra.mxu0 0.0
    %2790 = vmatpush.msra.mxu0 0.0
    %2791 = vmatpush.msra.mxu0 0.0
    %2792 = vmatpush.msra.mxu0 0.0
    %2793 = vmatpush.msra.mxu0 0.0
    %2794 = vmatpush.msra.mxu0 0.0
    %2795 = vmatpush.msra.mxu0 0.0
    %2796 = vmatpush.msra.mxu0 0.0
    %2797 = vmatpush.msra.mxu0 0.0
    %2798 = vmatpush.msra.mxu0 0.0
    %2799 = vmatpush.msra.mxu0 0.0
    %2800 = vmatpush.msra.mxu0 0.0
    %2801 = vmatpush.msra.mxu0 0.0
    %2802 = vmatpush.msra.mxu0 0.0
    %2803 = vmatpush.msra.mxu0 %v2787
    %2804 = vmatpush.msra.mxu0 %v2585
    %2805 = vmatmul.f32.gmra.mxu0 %v2784
    %v2806 = vpop.f32.mrf.mxu0
    %v2807 = vadd.f32 0.0, %v2806
    %2808 = vdwg.mxu0
    %v2810 = vsel %vm2599, %v2565, 0
    %v2813 = vsel %vm2603, %v2588, 0
    %2815 = vmatpush.msra.mxu0 0.0
    %2816 = vmatpush.msra.mxu0 0.0
    %2817 = vmatpush.msra.mxu0 0.0
    %2818 = vmatpush.msra.mxu0 0.0
    %2819 = vmatpush.msra.mxu0 0.0
    %2820 = vmatpush.msra.mxu0 0.0
    %2821 = vmatpush.msra.mxu0 0.0
    %2822 = vmatpush.msra.mxu0 0.0
    %2823 = vmatpush.msra.mxu0 0.0
    %2824 = vmatpush.msra.mxu0 0.0
    %2825 = vmatpush.msra.mxu0 0.0
    %2826 = vmatpush.msra.mxu0 0.0
    %2827 = vmatpush.msra.mxu0 0.0
    %2828 = vmatpush.msra.mxu0 0.0
    %2829 = vmatpush.msra.mxu0 %v2813
    %2830 = vmatpush.msra.mxu0 %v2587
    %2831 = vmatmul.f32.gmra.mxu0 %v2810
    %v2832 = vpop.f32.mrf.mxu0
    %v2833 = vadd.f32 0.0, %v2832
    %2834 = vdwg.mxu0
    %v2836 = vsel %vm2599, %v2566, 0
    %v2839 = vsel %vm2603, %v2590, 0
    %2841 = vmatpush.msra.mxu0 0.0
    %2842 = vmatpush.msra.mxu0 0.0
    %2843 = vmatpush.msra.mxu0 0.0
    %2844 = vmatpush.msra.mxu0 0.0
    %2845 = vmatpush.msra.mxu0 0.0
    %2846 = vmatpush.msra.mxu0 0.0
    %2847 = vmatpush.msra.mxu0 0.0
    %2848 = vmatpush.msra.mxu0 0.0
    %2849 = vmatpush.msra.mxu0 0.0
    %2850 = vmatpush.msra.mxu0 0.0
    %2851 = vmatpush.msra.mxu0 0.0
    %2852 = vmatpush.msra.mxu0 0.0
    %2853 = vmatpush.msra.mxu0 0.0
    %2854 = vmatpush.msra.mxu0 0.0
    %2855 = vmatpush.msra.mxu0 %v2839
    %2856 = vmatpush.msra.mxu0 %v2589
    %2857 = vmatmul.f32.gmra.mxu0 %v2836
    %v2858 = vpop.f32.mrf.mxu0
    %v2859 = vadd.f32 0.0, %v2858
    %2860 = vdwg.mxu0
    %v2862 = vsel %vm2599, %v2567, 0
    %v2865 = vsel %vm2603, %v2592, 0
    %2867 = vmatpush.msra.mxu0 0.0
    %2868 = vmatpush.msra.mxu0 0.0
    %2869 = vmatpush.msra.mxu0 0.0
    %2870 = vmatpush.msra.mxu0 0.0
    %2871 = vmatpush.msra.mxu0 0.0
    %2872 = vmatpush.msra.mxu0 0.0
    %2873 = vmatpush.msra.mxu0 0.0
    %2874 = vmatpush.msra.mxu0 0.0
    %2875 = vmatpush.msra.mxu0 0.0
    %2876 = vmatpush.msra.mxu0 0.0
    %2877 = vmatpush.msra.mxu0 0.0
    %2878 = vmatpush.msra.mxu0 0.0
    %2879 = vmatpush.msra.mxu0 0.0
    %2880 = vmatpush.msra.mxu0 0.0
    %2881 = vmatpush.msra.mxu0 %v2865
    %2882 = vmatpush.msra.mxu0 %v2591
    %2883 = vmatmul.f32.gmra.mxu0 %v2862
    %v2884 = vpop.f32.mrf.mxu0
    %v2885 = vadd.f32 0.0, %v2884
    %2886 = vdwg.mxu0
    %v2888 = vsel %vm2599, %v2568, 0
    %v2891 = vsel %vm2603, %v2594, 0
    %2893 = vmatpush.msra.mxu0 0.0
    %2894 = vmatpush.msra.mxu0 0.0
    %2895 = vmatpush.msra.mxu0 0.0
    %2896 = vmatpush.msra.mxu0 0.0
    %2897 = vmatpush.msra.mxu0 0.0
    %2898 = vmatpush.msra.mxu0 0.0
    %2899 = vmatpush.msra.mxu0 0.0
    %2900 = vmatpush.msra.mxu0 0.0
    %2901 = vmatpush.msra.mxu0 0.0
    %2902 = vmatpush.msra.mxu0 0.0
    %2903 = vmatpush.msra.mxu0 0.0
    %2904 = vmatpush.msra.mxu0 0.0
    %2905 = vmatpush.msra.mxu0 0.0
    %2906 = vmatpush.msra.mxu0 0.0
    %2907 = vmatpush.msra.mxu0 %v2891
    %2908 = vmatpush.msra.mxu0 %v2593
    %2909 = vmatmul.f32.gmra.mxu0 %v2888
    %v2910 = vpop.f32.mrf.mxu0
    %v2911 = vadd.f32 0.0, %v2910
    %2912 = vdwg.mxu0
    %v2914 = vsel %vm2599, %v2569, 0
    %v2917 = vsel %vm2603, %v2596, 0
    %2919 = vmatpush.msra.mxu0 0.0
    %2920 = vmatpush.msra.mxu0 0.0
    %2921 = vmatpush.msra.mxu0 0.0
    %2922 = vmatpush.msra.mxu0 0.0
    %2923 = vmatpush.msra.mxu0 0.0
    %2924 = vmatpush.msra.mxu0 0.0
    %2925 = vmatpush.msra.mxu0 0.0
    %2926 = vmatpush.msra.mxu0 0.0
    %2927 = vmatpush.msra.mxu0 0.0
    %2928 = vmatpush.msra.mxu0 0.0
    %2929 = vmatpush.msra.mxu0 0.0
    %2930 = vmatpush.msra.mxu0 0.0
    %2931 = vmatpush.msra.mxu0 0.0
    %2932 = vmatpush.msra.mxu0 0.0
    %2933 = vmatpush.msra.mxu0 %v2917
    %2934 = vmatpush.msra.mxu0 %v2595
    %2935 = vmatmul.f32.gmra.mxu0 %v2914
    %v2936 = vpop.f32.mrf.mxu0
    %v2937 = vadd.f32 0.0, %v2936
    %2938 = vdwg.mxu0
    %v2940 = vsel %vm2599, %v2570, 0
    %v2943 = vsel %vm2603, %v2598, 0
    %2945 = vmatpush.msra.mxu0 0.0
    %2946 = vmatpush.msra.mxu0 0.0
    %2947 = vmatpush.msra.mxu0 0.0
    %2948 = vmatpush.msra.mxu0 0.0
    %2949 = vmatpush.msra.mxu0 0.0
    %2950 = vmatpush.msra.mxu0 0.0
    %2951 = vmatpush.msra.mxu0 0.0
    %2952 = vmatpush.msra.mxu0 0.0
    %2953 = vmatpush.msra.mxu0 0.0
    %2954 = vmatpush.msra.mxu0 0.0
    %2955 = vmatpush.msra.mxu0 0.0
    %2956 = vmatpush.msra.mxu0 0.0
    %2957 = vmatpush.msra.mxu0 0.0
    %2958 = vmatpush.msra.mxu0 0.0
    %2959 = vmatpush.msra.mxu0 %v2943
    %2960 = vmatpush.msra.mxu0 %v2597
    %2961 = vmatmul.f32.gmra.mxu0 %v2940
    %v2962 = vpop.f32.mrf.mxu0
    %v2963 = vadd.f32 0.0, %v2962
    %2964 = vdwg.mxu0
    %v2965 = vld [vmem:[%s4] sm:$0x1]
    %vm2966 = vcmask 1041408
    %v2967 = vsel %vm2966, %v2625, 0.0
    %v2968 = vsel %vm2966, %v2651, 0.0
    %v2969 = vadd.f32 %v2967, %v2968
    %v2970 = vsel %vm2966, %v2677, 0.0
    %v2971 = vadd.f32 %v2969, %v2970
    %v2972 = vsel %vm2966, %v2703, 0.0
    %v2973 = vadd.f32 %v2971, %v2972
    %v2974 = vsel %vm2966, %v2729, 0.0
    %v2975 = vadd.f32 %v2973, %v2974
    %v2976 = vsel %vm2966, %v2755, 0.0
    %v2977 = vadd.f32 %v2975, %v2976
    %v2978 = vsel %vm2966, %v2781, 0.0
    %v2979 = vadd.f32 %v2977, %v2978
    %v2980 = vsel %vm2966, %v2807, 0.0
    %v2981 = vadd.f32 %v2979, %v2980
    %v2982 = vsel %vm2966, %v2833, 0.0
    %v2983 = vadd.f32 %v2981, %v2982
    %v2984 = vsel %vm2966, %v2859, 0.0
    %v2985 = vadd.f32 %v2983, %v2984
    %v2986 = vsel %vm2966, %v2885, 0.0
    %v2987 = vadd.f32 %v2985, %v2986
    %v2988 = vsel %vm2966, %v2911, 0.0
    %v2989 = vadd.f32 %v2987, %v2988
    %v2990 = vsel %vm2966, %v2937, 0.0
    %v2991 = vadd.f32 %v2989, %v2990
    %v2992 = vsel %vm2966, %v2963, 0.0
    %v2993 = vadd.f32 %v2991, %v2992
    %v2995 = vperm.slane %v2965, 0
    %v2997 = vadd.f32 %v2995, %v2993
    %2998 = vst [vmem:[#allocation10] sm:$0x3] %v2997
    // Predicated region
    $region34: #{tpu_custom_call.1} parent=1 // pred_check
      _
    $region35: #{tpu_custom_call.1} parent=1 // pred_check_branch
      %3000 = sbr.rel (0) target = $region37
    $region36: #{tpu_custom_call.1} parent=1 // pred_region
      %3002 = vsyncadd [#allocation5], 0
      %s3004 = sshll.u32 [#allocation10], 4
      %s3005 = int_to_ptr.vmem [resolvable:$true] %s3004
      %s3006 = sshll.u32 %s5, 4
      %s3007 = int_to_ptr.hbm [resolvable:$true] %s3006
      %3009 = dma.vmem_to_hbm [thread:$0]  %s3005, 32, %s3007, [#allocation5]
    $region37: #{tpu_custom_call.1} parent=1 // pred_fallthru
      _
    // Predicated region
    $region38: #{tpu_custom_call.1} parent=1 // pred_check
      _
    $region39: #{tpu_custom_call.1} parent=1 // pred_check_branch
      %3011 = sbr.rel (0) target = $region41
    $region40: #{tpu_custom_call.1} parent=1 // pred_region
      %3013 = dma.done [#allocation5], 32
    $region41: #{tpu_custom_call.1} parent=1 // pred_fallthru
      _
    %3014 = vsyncpa [#allocation4], 1
    %3015 = vsyncpa [#allocation9], 1
    %3016 = vsyncpa [#allocation5], 1
    %3017 = vsyncpa [#allocation6], 1

</llo_original>
